<compile_context>
chip_gen: v7x
topology: tpu7x:2x2x1
jax: 0.10.0
libtpu: 0.0.40
codegen_flags: <defaults>
</compile_context>

<pallas_src>
import jax
import jax.numpy as jnp
from jax.experimental import pallas as pl
from jax.experimental.pallas import tpu as pltpu

IN_FEATURES = 28 * 28     # 784
HIDDEN = 512
OUT_FEATURES = 10
N_PAD = 128               # 10 padded up to one full lane width


def _round_up(x, m):
    return (x + m - 1) // m * m


def mlp_kernel(x_ref, w1_ref, b1_ref, w2_ref, b2_ref, o_ref):
    # Weights arrive pre-cast to the compute dtype; only the streamed
    # activations are cast in-kernel (f32 HBM -> compute dtype on VPU).
    x = x_ref[...].astype(w1_ref.dtype)
    # First linear: (TB, 784) @ (784, 512), f32 accumulation, + b1, ReLU.
    h = jnp.dot(x, w1_ref[...], preferred_element_type=jnp.float32)
    h = jnp.maximum(h + b1_ref[...], 0.0)
    # Second linear: (TB, 512) @ (512, 128), f32 accumulation, + b2.
    out = jnp.dot(h.astype(w2_ref.dtype), w2_ref[...],
                  preferred_element_type=jnp.float32) + b2_ref[...]
    o_ref[...] = out.astype(o_ref.dtype)


def neural_network_forward(x_nchw, w1, b1, w2, b2, *, tb=1024, use_bf16=True):
    """x_nchw: (B, 1, 28, 28) float32. Returns (B, 10) float32 logits.

    tb       : target batch tile (rows per grid step); rounded to multiple of 8
               and capped so the grid has >= 2 steps (v7x dual-TC utilization).
    use_bf16 : matmul inputs in bf16 with f32 accumulation (default; required
               for peak MXU throughput on v5e, roofline-friendly on v6e/v7x).
    """
    B = x_nchw.shape[0]
    # Flatten is a free row-major reshape (no HBM copy); keep activations f32
    # so no extra wrapper-side cast pass is materialized over x.
    x2d = x_nchw.reshape(B, IN_FEATURES).astype(jnp.float32)

    compute_dtype = jnp.bfloat16 if use_bf16 else jnp.float32

    # One-time weight prep (tiny vs. activation traffic):
    #   w1: (784, 512) pre-cast; w2: (512, 10) -> (512, 128) pad + pre-cast.
    #   Biases stay f32 (added after f32 accumulation).
    w1c = w1.astype(compute_dtype)
    w2c = jnp.pad(w2, ((0, 0), (0, N_PAD - OUT_FEATURES))).astype(compute_dtype)
    b1r = b1.reshape(1, HIDDEN).astype(jnp.float32)
    b2r = jnp.pad(b2, (0, N_PAD - OUT_FEATURES)).reshape(1, N_PAD).astype(jnp.float32)

    # Batch tile: large to amortize per-step overhead, capped so the "parallel"
    # grid axis has at least 2 steps for the 2 TensorCores on v7x.
    TB = max(8, min(_round_up(tb, 8), _round_up(pl.cdiv(B, 2), 8)))
    grid = (pl.cdiv(B, TB),)

    flops = 2 * B * (IN_FEATURES * HIDDEN + HIDDEN * N_PAD)
    bytes_accessed = (x2d.size * 4
                      + w1c.size * w1c.dtype.itemsize
                      + w2c.size * w2c.dtype.itemsize
                      + b1r.size * 4 + b2r.size * 4
                      + B * N_PAD * 4)

    out_padded = pl.pallas_call(
        mlp_kernel,
        out_shape=jax.ShapeDtypeStruct((B, N_PAD), jnp.float32),
        grid=grid,
        in_specs=[
            pl.BlockSpec((TB, IN_FEATURES), lambda i: (i, 0)),     # activations
            pl.BlockSpec((IN_FEATURES, HIDDEN), lambda i: (0, 0)), # w1 (resident)
            pl.BlockSpec((1, HIDDEN), lambda i: (0, 0)),           # b1 (resident)
            pl.BlockSpec((HIDDEN, N_PAD), lambda i: (0, 0)),       # w2 (resident)
            pl.BlockSpec((1, N_PAD), lambda i: (0, 0)),            # b2 (resident)
        ],
        out_specs=pl.BlockSpec((TB, N_PAD), lambda i: (i, 0)),
        compiler_params=pltpu.CompilerParams(
            dimension_semantics=("parallel",),          # megacore / 2 TCs on v7x
            vmem_limit_bytes=48 * 1024 * 1024),         # headroom for big TB
        cost_estimate=pl.CostEstimate(
            flops=flops, transcendentals=0, bytes_accessed=bytes_accessed),
    )(x2d, w1c, b1r, w2c, b2r)

    # Drop the lane padding. Rows past B never exist in out_shape, and the
    # ragged last input tile's junk rows never reach a visible output element.
    return out_padded[:, :OUT_FEATURES]


def init_params(key):
    """Deterministic init mimicking PyTorch Linear default U(-1/sqrt(fan_in), +)."""
    k1, k2, k3, k4 = jax.random.split(key, 4)
    bound1 = 1.0 / (IN_FEATURES ** 0.5)
    bound2 = 1.0 / (HIDDEN ** 0.5)
    # Stored as (in, out) so the kernel does x @ W (equivalent to PyTorch x @ W.T).
    w1 = jax.random.uniform(k1, (IN_FEATURES, HIDDEN), jnp.float32, -bound1, bound1)
    b1 = jax.random.uniform(k2, (HIDDEN,), jnp.float32, -bound1, bound1)
    w2 = jax.random.uniform(k3, (HIDDEN, OUT_FEATURES), jnp.float32, -bound2, bound2)
    b2 = jax.random.uniform(k4, (OUT_FEATURES,), jnp.float32, -bound2, bound2)
    return w1, b1, w2, b2


if __name__ == "__main__":
    key = jax.random.PRNGKey(0)
    k_params, k_x1, k_x2 = jax.random.split(key, 3)
    w1, b1, w2, b2 = init_params(k_params)

    # Small-shape check (single grid step), f32 path — tight tolerance.
    B = 8
    x = jax.random.normal(k_x1, (B, 1, 28, 28), jnp.float32)   # NCHW like PyTorch
    out = jax.block_until_ready(
        neural_network_forward(x, w1, b1, w2, b2, use_bf16=False))
    ref = jnp.maximum(x.reshape(B, -1) @ w1 + b1, 0.0) @ w2 + b2
    assert out.shape == (B, OUT_FEATURES)
    assert jnp.allclose(out, ref, atol=1e-4, rtol=1e-4)

    # Ragged batch + multi-step grid (exercises ragged last tile, no x copies).
    B2 = 300
    x2 = jax.random.normal(k_x2, (B2, 1, 28, 28), jnp.float32)
    ref2 = jnp.maximum(x2.reshape(B2, -1) @ w1 + b1, 0.0) @ w2 + b2

    out2_f32 = jax.block_until_ready(
        neural_network_forward(x2, w1, b1, w2, b2, tb=128, use_bf16=False))
    assert out2_f32.shape == (B2, OUT_FEATURES)
    assert jnp.allclose(out2_f32, ref2, atol=1e-4, rtol=1e-4)

    # Default path: bf16 MXU compute (f32 accumulation), TB capped to 2 grid
    # steps for v7x dual-TC — looser tolerance from the bf16 input/weight cast.
    out2_bf16 = jax.block_until_ready(
        neural_network_forward(x2, w1, b1, w2, b2))
    assert out2_bf16.shape == (B2, OUT_FEATURES)
    assert jnp.allclose(out2_bf16, ref2, atol=5e-2, rtol=5e-2)

    print("KERNEL_OK")
</pallas_src>

<mosaic_0001>
module attributes {stable_mosaic.version = 11 : i64} {
  func.func @mlp_kernel(%arg0: i32, %arg1: memref<8x784xf32, #tpu.memory_space<vmem>>, %arg2: memref<784x512xf32, #tpu.memory_space<vmem>>, %arg3: memref<1x512xf32, #tpu.memory_space<vmem>>, %arg4: memref<512x128xf32, #tpu.memory_space<vmem>>, %arg5: memref<1x128xf32, #tpu.memory_space<vmem>>, %arg6: memref<8x128xf32, #tpu.memory_space<vmem>>) attributes {dimension_semantics = [#tpu.dimension_semantics<parallel>], iteration_bounds = array<i64: 1>, scalar_prefetch = 0 : i64, scratch_operands = 0 : i64, tpu.core_type = #tpu.core_type<tc>, window_params = [{transform_indices = @transform_0, window_bounds = array<i64: 8, 784>}, {pipeline_mode = #tpu.pipeline_mode<synchronous>, transform_indices = @transform_1, window_bounds = array<i64: 784, 512>}, {pipeline_mode = #tpu.pipeline_mode<synchronous>, transform_indices = @transform_2, window_bounds = array<i64: 1, 512>}, {pipeline_mode = #tpu.pipeline_mode<synchronous>, transform_indices = @transform_3, window_bounds = array<i64: 512, 128>}, {pipeline_mode = #tpu.pipeline_mode<synchronous>, transform_indices = @transform_4, window_bounds = array<i64: 1, 128>}, {transform_indices = @transform_5, window_bounds = array<i64: 8, 128>}]} {
    %c0 = arith.constant 0 : index
    %c0_0 = arith.constant 0 : index
    %0 = vector.load %arg1[%c0, %c0_0] : memref<8x784xf32, #tpu.memory_space<vmem>>, vector<8x784xf32>
    %c0_1 = arith.constant 0 : index
    %c0_2 = arith.constant 0 : index
    %1 = vector.load %arg2[%c0_1, %c0_2] : memref<784x512xf32, #tpu.memory_space<vmem>>, vector<784x512xf32>
    %cst = arith.constant dense<0.000000e+00> : vector<8x512xf32>
    %2 = tpu.matmul %0, %1, %cst {dimension_numbers = #tpu.dot_dimension_numbers<[1], [0], [0], [1], [0, 0, 1, 1], [], []>} : vector<8x784xf32>, vector<784x512xf32>, vector<8x512xf32> -> vector<8x512xf32>
    %c0_3 = arith.constant 0 : index
    %c0_4 = arith.constant 0 : index
    %3 = vector.load %arg3[%c0_3, %c0_4] : memref<1x512xf32, #tpu.memory_space<vmem>>, vector<1x512xf32>
    %4 = vector.broadcast %3 : vector<1x512xf32> to vector<8x512xf32>
    %5 = arith.addf %2, %4 : vector<8x512xf32>
    %cst_5 = arith.constant 0.000000e+00 : f32
    %6 = vector.broadcast %cst_5 : f32 to vector<8x512xf32>
    %7 = arith.maximumf %5, %6 : vector<8x512xf32>
    %c0_6 = arith.constant 0 : index
    %c0_7 = arith.constant 0 : index
    %8 = vector.load %arg4[%c0_6, %c0_7] : memref<512x128xf32, #tpu.memory_space<vmem>>, vector<512x128xf32>
    %cst_8 = arith.constant dense<0.000000e+00> : vector<8x128xf32>
    %9 = tpu.matmul %7, %8, %cst_8 {dimension_numbers = #tpu.dot_dimension_numbers<[1], [0], [0], [1], [0, 0, 1, 1], [], []>} : vector<8x512xf32>, vector<512x128xf32>, vector<8x128xf32> -> vector<8x128xf32>
    %c0_9 = arith.constant 0 : index
    %c0_10 = arith.constant 0 : index
    %10 = vector.load %arg5[%c0_9, %c0_10] : memref<1x128xf32, #tpu.memory_space<vmem>>, vector<1x128xf32>
    %11 = vector.broadcast %10 : vector<1x128xf32> to vector<8x128xf32>
    %12 = arith.addf %9, %11 : vector<8x128xf32>
    %c0_11 = arith.constant 0 : index
    %c0_12 = arith.constant 0 : index
    %13 = vector.load %arg6[%c0_11, %c0_12] : memref<8x128xf32, #tpu.memory_space<vmem>>, vector<8x128xf32>
    tpu.vector_store %arg6[%c0_11, %c0_12], %12 {strides = array<i32>} : memref<8x128xf32, #tpu.memory_space<vmem>>, vector<8x128xf32>,
    return
  }
  func.func @transform_0(%arg0: i32) -> (i32, i32) {
    %c0_i32 = arith.constant 0 : i32
    %c0_i32_0 = arith.constant 0 : i32
    return %arg0, %c0_i32 : i32, i32
  }
  func.func @transform_1(%arg0: i32) -> (i32, i32) {
    %c0_i32 = arith.constant 0 : i32
    %c0_i32_0 = arith.constant 0 : i32
    %c0_i32_1 = arith.constant 0 : i32
    return %c0_i32, %c0_i32_0 : i32, i32
  }
  func.func @transform_2(%arg0: i32) -> (i32, i32) {
    %c0_i32 = arith.constant 0 : i32
    %c0_i32_0 = arith.constant 0 : i32
    %c0_i32_1 = arith.constant 0 : i32
    return %c0_i32, %c0_i32_0 : i32, i32
  }
  func.func @transform_3(%arg0: i32) -> (i32, i32) {
    %c0_i32 = arith.constant 0 : i32
    %c0_i32_0 = arith.constant 0 : i32
    %c0_i32_1 = arith.constant 0 : i32
    return %c0_i32, %c0_i32_0 : i32, i32
  }
  func.func @transform_4(%arg0: i32) -> (i32, i32) {
    %c0_i32 = arith.constant 0 : i32
    %c0_i32_0 = arith.constant 0 : i32
    %c0_i32_1 = arith.constant 0 : i32
    return %c0_i32, %c0_i32_0 : i32, i32
  }
  func.func @transform_5(%arg0: i32) -> (i32, i32) {
    %c0_i32 = arith.constant 0 : i32
    %c0_i32_0 = arith.constant 0 : i32
    return %arg0, %c0_i32 : i32, i32
  }
}

</mosaic_0001>

<llo_original>
// kernel: tpu_custom_call.1
$region0: #{tpu_custom_call.1}
  #allocation0 [shape = 'u32[]', space=smem, size = 0x4, offset = 0x4, fixed_abs, tag = 'smem constant byte address 0x4 - core index']
  #allocation1 [shape = 'u32[144,128]{1,0:T(1,128)}', space=vmem, size = 0x12000, scoped, tag = 'internal scratch']
  %s0 = inlined_call_operand.hbm [shape: f32[8,784], index: 0, kind: input, shape index: {}]
  %s1 = inlined_call_operand.hbm [shape: f32[784,512], index: 1, kind: input, shape index: {}]
  %s2 = inlined_call_operand.hbm [shape: f32[1,512], index: 2, kind: input, shape index: {}]
  %s3 = inlined_call_operand.hbm [shape: f32[512,128], index: 3, kind: input, shape index: {}]
  %s4 = inlined_call_operand.hbm [shape: f32[1,128], index: 4, kind: input, shape index: {}]
  %s5 = inlined_call_operand.hbm [shape: f32[8,128], index: 5, kind: output, shape index: {}]
  %s6 = sld [smem:[#allocation0]]
  $region50: #{tpu_custom_call.1} parent=0
    _
  %s8 = ssub.s32 1, %s6
  %s9 = scalar_select 0, %s8, %s6
  $region1: #{tpu_custom_call.1} parent=0
    #allocation2 [shape = 'u8[28672]{0}', space=vmem, size = 0x7000, scoped, tag = 'input window, operand 0, single buffered']
    #allocation3 [shape = 's32[1]{0}', space=sflag, size = 0x4, scoped, tag = 'scoped memory for tpu_custom_call.1']
    #allocation4 [shape = 's32[1]{0}', space=sflag, size = 0x4, scoped, tag = 'scoped memory for tpu_custom_call.1']
    #allocation5 [shape = 'u8[1605632]{0}', space=vmem, size = 0x188000, scoped, tag = 'input window, operand 1, single buffered']
    #allocation6 [shape = 's32[1]{0}', space=sflag, size = 0x4, scoped, tag = 'scoped memory for tpu_custom_call.1']
    #allocation7 [shape = 'u8[2048]{0}', space=vmem, size = 0x800, scoped, tag = 'input window, operand 2, single buffered']
    #allocation8 [shape = 'u8[262144]{0}', space=vmem, size = 0x40000, scoped, tag = 'input window, operand 3, single buffered']
    #allocation9 [shape = 's32[1]{0}', space=sflag, size = 0x4, scoped, tag = 'scoped memory for tpu_custom_call.1']
    #allocation10 [shape = 'u8[512]{0}', space=vmem, size = 0x400, scoped, tag = 'input window, operand 4, single buffered']
    #allocation11 [shape = 'u8[4096]{0}', space=vmem, size = 0x1000, scoped, tag = 'output window, operand 0, single buffered']
    %10 = vsyncpa [#allocation3], 0
    %11 = vsyncpa [#allocation6], 0
    %12 = vsyncpa [#allocation9], 0
    %13 = vsyncpa [#allocation4], 0
    // Predicated region
    $region2: #{tpu_custom_call.1} parent=1 // pred_check
      _
    $region3: #{tpu_custom_call.1} parent=1 // pred_check_branch
      %15 = sbr.rel (0) target = $region5
    $region4: #{tpu_custom_call.1} parent=1 // pred_region
      %s17 = ssub.s32 896, 896
      %18 = vsyncadd [#allocation3], %s17
      %s20 = sshll.u32 [#allocation2], 4
      %s21 = int_to_ptr.vmem [resolvable:$true] %s20
      %23 = dma.hbm_to_vmem [thread:$0]  %s0, 896, %s21, [#allocation3]
    $region5: #{tpu_custom_call.1} parent=1 // pred_fallthru
      _
    // Predicated region
    $region6: #{tpu_custom_call.1} parent=1 // pred_check
      _
    $region7: #{tpu_custom_call.1} parent=1 // pred_check_branch
      %25 = sbr.rel (0) target = $region9
    $region8: #{tpu_custom_call.1} parent=1 // pred_region
      %s27 = ssub.s32 50176, 50176
      %28 = vsyncadd [#allocation6], %s27
      %s29 = sshll.u32 [#allocation5], 4
      %s30 = int_to_ptr.vmem [resolvable:$true] %s29
      %35 = dma.hbm_to_vmem [thread:$0]  %s1, 50176, %s30, [#allocation6], 512, 512, 32
    $region9: #{tpu_custom_call.1} parent=1 // pred_fallthru
      _
    // Predicated region
    $region10: #{tpu_custom_call.1} parent=1 // pred_check
      _
    $region11: #{tpu_custom_call.1} parent=1 // pred_check_branch
      %37 = sbr.rel (0) target = $region13
    $region12: #{tpu_custom_call.1} parent=1 // pred_region
      %s39 = ssub.s32 64, 64
      %40 = vsyncadd [#allocation6], %s39
      %s42 = sshll.u32 [#allocation7], 4
      %s43 = int_to_ptr.vmem [resolvable:$true] %s42
      %45 = dma.hbm_to_vmem [thread:$0]  %s2, 64, %s43, [#allocation6]
    $region13: #{tpu_custom_call.1} parent=1 // pred_fallthru
      _
    // Predicated region
    $region14: #{tpu_custom_call.1} parent=1 // pred_check
      _
    $region15: #{tpu_custom_call.1} parent=1 // pred_check_branch
      %47 = sbr.rel (0) target = $region17
    $region16: #{tpu_custom_call.1} parent=1 // pred_region
      %s49 = ssub.s32 8192, 8192
      %50 = vsyncadd [#allocation9], %s49
      %s51 = sshll.u32 [#allocation8], 4
      %s52 = int_to_ptr.vmem [resolvable:$true] %s51
      %57 = dma.hbm_to_vmem [thread:$0]  %s3, 8192, %s52, [#allocation9], 128, 128, 8
    $region17: #{tpu_custom_call.1} parent=1 // pred_fallthru
      _
    // Predicated region
    $region18: #{tpu_custom_call.1} parent=1 // pred_check
      _
    $region19: #{tpu_custom_call.1} parent=1 // pred_check_branch
      %59 = sbr.rel (0) target = $region21
    $region20: #{tpu_custom_call.1} parent=1 // pred_region
      %s61 = ssub.s32 16, 16
      %62 = vsyncadd [#allocation9], %s61
      %s64 = sshll.u32 [#allocation10], 4
      %s65 = int_to_ptr.vmem [resolvable:$true] %s64
      %67 = dma.hbm_to_vmem [thread:$0]  %s4, 16, %s65, [#allocation9]
    $region21: #{tpu_custom_call.1} parent=1 // pred_fallthru
      _
    // Predicated region
    $region22: #{tpu_custom_call.1} parent=1 // pred_check
      _
    $region23: #{tpu_custom_call.1} parent=1 // pred_check_branch
      %69 = sbr.rel (0) target = $region25
    $region24: #{tpu_custom_call.1} parent=1 // pred_region
      %70 = dma.done [#allocation3], 896
    $region25: #{tpu_custom_call.1} parent=1 // pred_fallthru
      _
    // Predicated region
    $region26: #{tpu_custom_call.1} parent=1 // pred_check
      _
    $region27: #{tpu_custom_call.1} parent=1 // pred_check_branch
      %72 = sbr.rel (0) target = $region29
    $region28: #{tpu_custom_call.1} parent=1 // pred_region
      %73 = dma.done [#allocation6], 50176
    $region29: #{tpu_custom_call.1} parent=1 // pred_fallthru
      _
    // Predicated region
    $region30: #{tpu_custom_call.1} parent=1 // pred_check
      _
    $region31: #{tpu_custom_call.1} parent=1 // pred_check_branch
      %75 = sbr.rel (0) target = $region33
    $region32: #{tpu_custom_call.1} parent=1 // pred_region
      %76 = dma.done [#allocation6], 64
    $region33: #{tpu_custom_call.1} parent=1 // pred_fallthru
      _
    // Predicated region
    $region34: #{tpu_custom_call.1} parent=1 // pred_check
      _
    $region35: #{tpu_custom_call.1} parent=1 // pred_check_branch
      %78 = sbr.rel (0) target = $region37
    $region36: #{tpu_custom_call.1} parent=1 // pred_region
      %79 = dma.done [#allocation9], 8192
    $region37: #{tpu_custom_call.1} parent=1 // pred_fallthru
      _
    // Predicated region
    $region38: #{tpu_custom_call.1} parent=1 // pred_check
      _
    $region39: #{tpu_custom_call.1} parent=1 // pred_check_branch
      %81 = sbr.rel (0) target = $region41
    $region40: #{tpu_custom_call.1} parent=1 // pred_region
      %82 = dma.done [#allocation9], 16
    $region41: #{tpu_custom_call.1} parent=1 // pred_fallthru
      _
    %v83 = vld [vmem:[#allocation2] sm:$0xff]
    %v84 = vld [vmem:[#allocation2 + $0x8] sm:$0xff]
    %v85 = vld [vmem:[#allocation2 + $0x10] sm:$0xff]
    %v86 = vld [vmem:[#allocation2 + $0x18] sm:$0xff]
    %v87 = vld [vmem:[#allocation2 + $0x20] sm:$0xff]
    %v88 = vld [vmem:[#allocation2 + $0x28] sm:$0xff]
    %v89 = vld [vmem:[#allocation2 + $0x30] sm:$0xff]
    %v90 = vld [vmem:[#allocation5] sm:$0xff]
    %v91 = vld [vmem:[#allocation5 + $0x8] sm:$0xff]
    %v92 = vld [vmem:[#allocation5 + $0x10] sm:$0xff]
    %v93 = vld [vmem:[#allocation5 + $0x18] sm:$0xff]
    %v94 = vld [vmem:[#allocation5 + $0x20] sm:$0xff]
    %v95 = vld [vmem:[#allocation5 + $0x28] sm:$0xff]
    %v96 = vld [vmem:[#allocation5 + $0x30] sm:$0xff]
    %v97 = vld [vmem:[#allocation5 + $0x38] sm:$0xff]
    %v98 = vld [vmem:[#allocation5 + $0x40] sm:$0xff]
    %v99 = vld [vmem:[#allocation5 + $0x48] sm:$0xff]
    %v100 = vld [vmem:[#allocation5 + $0x50] sm:$0xff]
    %v101 = vld [vmem:[#allocation5 + $0x58] sm:$0xff]
    %v102 = vld [vmem:[#allocation5 + $0x60] sm:$0xff]
    %v103 = vld [vmem:[#allocation5 + $0x68] sm:$0xff]
    %v104 = vld [vmem:[#allocation5 + $0x70] sm:$0xff]
    %v105 = vld [vmem:[#allocation5 + $0x78] sm:$0xff]
    %v106 = vld [vmem:[#allocation5 + $0x80] sm:$0xff]
    %v107 = vld [vmem:[#allocation5 + $0x88] sm:$0xff]
    %v108 = vld [vmem:[#allocation5 + $0x90] sm:$0xff]
    %v109 = vld [vmem:[#allocation5 + $0x98] sm:$0xff]
    %v110 = vld [vmem:[#allocation5 + $0xa0] sm:$0xff]
    %v111 = vld [vmem:[#allocation5 + $0xa8] sm:$0xff]
    %v112 = vld [vmem:[#allocation5 + $0xb0] sm:$0xff]
    %v113 = vld [vmem:[#allocation5 + $0xb8] sm:$0xff]
    %v114 = vld [vmem:[#allocation5 + $0xc0] sm:$0xff]
    %v115 = vld [vmem:[#allocation5 + $0xc8] sm:$0xff]
    %v116 = vld [vmem:[#allocation5 + $0xd0] sm:$0xff]
    %v117 = vld [vmem:[#allocation5 + $0xd8] sm:$0xff]
    %v118 = vld [vmem:[#allocation5 + $0xe0] sm:$0xff]
    %v119 = vld [vmem:[#allocation5 + $0xe8] sm:$0xff]
    %v120 = vld [vmem:[#allocation5 + $0xf0] sm:$0xff]
    %v121 = vld [vmem:[#allocation5 + $0xf8] sm:$0xff]
    %v122 = vld [vmem:[#allocation5 + $0x100] sm:$0xff]
    %v123 = vld [vmem:[#allocation5 + $0x108] sm:$0xff]
    %v124 = vld [vmem:[#allocation5 + $0x110] sm:$0xff]
    %v125 = vld [vmem:[#allocation5 + $0x118] sm:$0xff]
    %v126 = vld [vmem:[#allocation5 + $0x120] sm:$0xff]
    %v127 = vld [vmem:[#allocation5 + $0x128] sm:$0xff]
    %v128 = vld [vmem:[#allocation5 + $0x130] sm:$0xff]
    %v129 = vld [vmem:[#allocation5 + $0x138] sm:$0xff]
    %v130 = vld [vmem:[#allocation5 + $0x140] sm:$0xff]
    %v131 = vld [vmem:[#allocation5 + $0x148] sm:$0xff]
    %v132 = vld [vmem:[#allocation5 + $0x150] sm:$0xff]
    %v133 = vld [vmem:[#allocation5 + $0x158] sm:$0xff]
    %v134 = vld [vmem:[#allocation5 + $0x160] sm:$0xff]
    %v135 = vld [vmem:[#allocation5 + $0x168] sm:$0xff]
    %v136 = vld [vmem:[#allocation5 + $0x170] sm:$0xff]
    %v137 = vld [vmem:[#allocation5 + $0x178] sm:$0xff]
    %v138 = vld [vmem:[#allocation5 + $0x180] sm:$0xff]
    %v139 = vld [vmem:[#allocation5 + $0x188] sm:$0xff]
    %v140 = vld [vmem:[#allocation5 + $0x190] sm:$0xff]
    %v141 = vld [vmem:[#allocation5 + $0x198] sm:$0xff]
    %v142 = vld [vmem:[#allocation5 + $0x1a0] sm:$0xff]
    %v143 = vld [vmem:[#allocation5 + $0x1a8] sm:$0xff]
    %v144 = vld [vmem:[#allocation5 + $0x1b0] sm:$0xff]
    %v145 = vld [vmem:[#allocation5 + $0x1b8] sm:$0xff]
    %v146 = vld [vmem:[#allocation5 + $0x1c0] sm:$0xff]
    %v147 = vld [vmem:[#allocation5 + $0x1c8] sm:$0xff]
    %v148 = vld [vmem:[#allocation5 + $0x1d0] sm:$0xff]
    %v149 = vld [vmem:[#allocation5 + $0x1d8] sm:$0xff]
    %v150 = vld [vmem:[#allocation5 + $0x1e0] sm:$0xff]
    %v151 = vld [vmem:[#allocation5 + $0x1e8] sm:$0xff]
    %v152 = vld [vmem:[#allocation5 + $0x1f0] sm:$0xff]
    %v153 = vld [vmem:[#allocation5 + $0x1f8] sm:$0xff]
    %v154 = vld [vmem:[#allocation5 + $0x200] sm:$0xff]
    %v155 = vld [vmem:[#allocation5 + $0x208] sm:$0xff]
    %v156 = vld [vmem:[#allocation5 + $0x210] sm:$0xff]
    %v157 = vld [vmem:[#allocation5 + $0x218] sm:$0xff]
    %v158 = vld [vmem:[#allocation5 + $0x220] sm:$0xff]
    %v159 = vld [vmem:[#allocation5 + $0x228] sm:$0xff]
    %v160 = vld [vmem:[#allocation5 + $0x230] sm:$0xff]
    %v161 = vld [vmem:[#allocation5 + $0x238] sm:$0xff]
    %v162 = vld [vmem:[#allocation5 + $0x240] sm:$0xff]
    %v163 = vld [vmem:[#allocation5 + $0x248] sm:$0xff]
    %v164 = vld [vmem:[#allocation5 + $0x250] sm:$0xff]
    %v165 = vld [vmem:[#allocation5 + $0x258] sm:$0xff]
    %v166 = vld [vmem:[#allocation5 + $0x260] sm:$0xff]
    %v167 = vld [vmem:[#allocation5 + $0x268] sm:$0xff]
    %v168 = vld [vmem:[#allocation5 + $0x270] sm:$0xff]
    %v169 = vld [vmem:[#allocation5 + $0x278] sm:$0xff]
    %v170 = vld [vmem:[#allocation5 + $0x280] sm:$0xff]
    %v171 = vld [vmem:[#allocation5 + $0x288] sm:$0xff]
    %v172 = vld [vmem:[#allocation5 + $0x290] sm:$0xff]
    %v173 = vld [vmem:[#allocation5 + $0x298] sm:$0xff]
    %v174 = vld [vmem:[#allocation5 + $0x2a0] sm:$0xff]
    %v175 = vld [vmem:[#allocation5 + $0x2a8] sm:$0xff]
    %v176 = vld [vmem:[#allocation5 + $0x2b0] sm:$0xff]
    %v177 = vld [vmem:[#allocation5 + $0x2b8] sm:$0xff]
    %v178 = vld [vmem:[#allocation5 + $0x2c0] sm:$0xff]
    %v179 = vld [vmem:[#allocation5 + $0x2c8] sm:$0xff]
    %v180 = vld [vmem:[#allocation5 + $0x2d0] sm:$0xff]
    %v181 = vld [vmem:[#allocation5 + $0x2d8] sm:$0xff]
    %v182 = vld [vmem:[#allocation5 + $0x2e0] sm:$0xff]
    %v183 = vld [vmem:[#allocation5 + $0x2e8] sm:$0xff]
    %v184 = vld [vmem:[#allocation5 + $0x2f0] sm:$0xff]
    %v185 = vld [vmem:[#allocation5 + $0x2f8] sm:$0xff]
    %v186 = vld [vmem:[#allocation5 + $0x300] sm:$0xff]
    %v187 = vld [vmem:[#allocation5 + $0x308] sm:$0xff]
    %v188 = vld [vmem:[#allocation5 + $0x310] sm:$0xff]
    %v189 = vld [vmem:[#allocation5 + $0x318] sm:$0xff]
    %v190 = vld [vmem:[#allocation5 + $0x320] sm:$0xff]
    %v191 = vld [vmem:[#allocation5 + $0x328] sm:$0xff]
    %v192 = vld [vmem:[#allocation5 + $0x330] sm:$0xff]
    %v193 = vld [vmem:[#allocation5 + $0x338] sm:$0xff]
    %v194 = vld [vmem:[#allocation5 + $0x340] sm:$0xff]
    %v195 = vld [vmem:[#allocation5 + $0x348] sm:$0xff]
    %v196 = vld [vmem:[#allocation5 + $0x350] sm:$0xff]
    %v197 = vld [vmem:[#allocation5 + $0x358] sm:$0xff]
    %v198 = vld [vmem:[#allocation5 + $0x360] sm:$0xff]
    %v199 = vld [vmem:[#allocation5 + $0x368] sm:$0xff]
    %v200 = vld [vmem:[#allocation5 + $0x370] sm:$0xff]
    %v201 = vld [vmem:[#allocation5 + $0x378] sm:$0xff]
    %v202 = vld [vmem:[#allocation5 + $0x380] sm:$0xff]
    %v203 = vld [vmem:[#allocation5 + $0x388] sm:$0xff]
    %v204 = vld [vmem:[#allocation5 + $0x390] sm:$0xff]
    %v205 = vld [vmem:[#allocation5 + $0x398] sm:$0xff]
    %v206 = vld [vmem:[#allocation5 + $0x3a0] sm:$0xff]
    %v207 = vld [vmem:[#allocation5 + $0x3a8] sm:$0xff]
    %v208 = vld [vmem:[#allocation5 + $0x3b0] sm:$0xff]
    %v209 = vld [vmem:[#allocation5 + $0x3b8] sm:$0xff]
    %v210 = vld [vmem:[#allocation5 + $0x3c0] sm:$0xff]
    %v211 = vld [vmem:[#allocation5 + $0x3c8] sm:$0xff]
    %v212 = vld [vmem:[#allocation5 + $0x3d0] sm:$0xff]
    %v213 = vld [vmem:[#allocation5 + $0x3d8] sm:$0xff]
    %v214 = vld [vmem:[#allocation5 + $0x3e0] sm:$0xff]
    %v215 = vld [vmem:[#allocation5 + $0x3e8] sm:$0xff]
    %v216 = vld [vmem:[#allocation5 + $0x3f0] sm:$0xff]
    %v217 = vld [vmem:[#allocation5 + $0x3f8] sm:$0xff]
    %v218 = vld [vmem:[#allocation5 + $0x400] sm:$0xff]
    %v219 = vld [vmem:[#allocation5 + $0x408] sm:$0xff]
    %v220 = vld [vmem:[#allocation5 + $0x410] sm:$0xff]
    %v221 = vld [vmem:[#allocation5 + $0x418] sm:$0xff]
    %v222 = vld [vmem:[#allocation5 + $0x420] sm:$0xff]
    %v223 = vld [vmem:[#allocation5 + $0x428] sm:$0xff]
    %v224 = vld [vmem:[#allocation5 + $0x430] sm:$0xff]
    %v225 = vld [vmem:[#allocation5 + $0x438] sm:$0xff]
    %v226 = vld [vmem:[#allocation5 + $0x440] sm:$0xff]
    %v227 = vld [vmem:[#allocation5 + $0x448] sm:$0xff]
    %v228 = vld [vmem:[#allocation5 + $0x450] sm:$0xff]
    %v229 = vld [vmem:[#allocation5 + $0x458] sm:$0xff]
    %v230 = vld [vmem:[#allocation5 + $0x460] sm:$0xff]
    %v231 = vld [vmem:[#allocation5 + $0x468] sm:$0xff]
    %v232 = vld [vmem:[#allocation5 + $0x470] sm:$0xff]
    %v233 = vld [vmem:[#allocation5 + $0x478] sm:$0xff]
    %v234 = vld [vmem:[#allocation5 + $0x480] sm:$0xff]
    %v235 = vld [vmem:[#allocation5 + $0x488] sm:$0xff]
    %v236 = vld [vmem:[#allocation5 + $0x490] sm:$0xff]
    %v237 = vld [vmem:[#allocation5 + $0x498] sm:$0xff]
    %v238 = vld [vmem:[#allocation5 + $0x4a0] sm:$0xff]
    %v239 = vld [vmem:[#allocation5 + $0x4a8] sm:$0xff]
    %v240 = vld [vmem:[#allocation5 + $0x4b0] sm:$0xff]
    %v241 = vld [vmem:[#allocation5 + $0x4b8] sm:$0xff]
    %v242 = vld [vmem:[#allocation5 + $0x4c0] sm:$0xff]
    %v243 = vld [vmem:[#allocation5 + $0x4c8] sm:$0xff]
    %v244 = vld [vmem:[#allocation5 + $0x4d0] sm:$0xff]
    %v245 = vld [vmem:[#allocation5 + $0x4d8] sm:$0xff]
    %v246 = vld [vmem:[#allocation5 + $0x4e0] sm:$0xff]
    %v247 = vld [vmem:[#allocation5 + $0x4e8] sm:$0xff]
    %v248 = vld [vmem:[#allocation5 + $0x4f0] sm:$0xff]
    %v249 = vld [vmem:[#allocation5 + $0x4f8] sm:$0xff]
    %v250 = vld [vmem:[#allocation5 + $0x500] sm:$0xff]
    %v251 = vld [vmem:[#allocation5 + $0x508] sm:$0xff]
    %v252 = vld [vmem:[#allocation5 + $0x510] sm:$0xff]
    %v253 = vld [vmem:[#allocation5 + $0x518] sm:$0xff]
    %v254 = vld [vmem:[#allocation5 + $0x520] sm:$0xff]
    %v255 = vld [vmem:[#allocation5 + $0x528] sm:$0xff]
    %v256 = vld [vmem:[#allocation5 + $0x530] sm:$0xff]
    %v257 = vld [vmem:[#allocation5 + $0x538] sm:$0xff]
    %v258 = vld [vmem:[#allocation5 + $0x540] sm:$0xff]
    %v259 = vld [vmem:[#allocation5 + $0x548] sm:$0xff]
    %v260 = vld [vmem:[#allocation5 + $0x550] sm:$0xff]
    %v261 = vld [vmem:[#allocation5 + $0x558] sm:$0xff]
    %v262 = vld [vmem:[#allocation5 + $0x560] sm:$0xff]
    %v263 = vld [vmem:[#allocation5 + $0x568] sm:$0xff]
    %v264 = vld [vmem:[#allocation5 + $0x570] sm:$0xff]
    %v265 = vld [vmem:[#allocation5 + $0x578] sm:$0xff]
    %v266 = vld [vmem:[#allocation5 + $0x580] sm:$0xff]
    %v267 = vld [vmem:[#allocation5 + $0x588] sm:$0xff]
    %v268 = vld [vmem:[#allocation5 + $0x590] sm:$0xff]
    %v269 = vld [vmem:[#allocation5 + $0x598] sm:$0xff]
    %v270 = vld [vmem:[#allocation5 + $0x5a0] sm:$0xff]
    %v271 = vld [vmem:[#allocation5 + $0x5a8] sm:$0xff]
    %v272 = vld [vmem:[#allocation5 + $0x5b0] sm:$0xff]
    %v273 = vld [vmem:[#allocation5 + $0x5b8] sm:$0xff]
    %v274 = vld [vmem:[#allocation5 + $0x5c0] sm:$0xff]
    %v275 = vld [vmem:[#allocation5 + $0x5c8] sm:$0xff]
    %v276 = vld [vmem:[#allocation5 + $0x5d0] sm:$0xff]
    %v277 = vld [vmem:[#allocation5 + $0x5d8] sm:$0xff]
    %v278 = vld [vmem:[#allocation5 + $0x5e0] sm:$0xff]
    %v279 = vld [vmem:[#allocation5 + $0x5e8] sm:$0xff]
    %v280 = vld [vmem:[#allocation5 + $0x5f0] sm:$0xff]
    %v281 = vld [vmem:[#allocation5 + $0x5f8] sm:$0xff]
    %v282 = vld [vmem:[#allocation5 + $0x600] sm:$0xff]
    %v283 = vld [vmem:[#allocation5 + $0x608] sm:$0xff]
    %v284 = vld [vmem:[#allocation5 + $0x610] sm:$0xff]
    %v285 = vld [vmem:[#allocation5 + $0x618] sm:$0xff]
    %v286 = vld [vmem:[#allocation5 + $0x620] sm:$0xff]
    %v287 = vld [vmem:[#allocation5 + $0x628] sm:$0xff]
    %v288 = vld [vmem:[#allocation5 + $0x630] sm:$0xff]
    %v289 = vld [vmem:[#allocation5 + $0x638] sm:$0xff]
    %v290 = vld [vmem:[#allocation5 + $0x640] sm:$0xff]
    %v291 = vld [vmem:[#allocation5 + $0x648] sm:$0xff]
    %v292 = vld [vmem:[#allocation5 + $0x650] sm:$0xff]
    %v293 = vld [vmem:[#allocation5 + $0x658] sm:$0xff]
    %v294 = vld [vmem:[#allocation5 + $0x660] sm:$0xff]
    %v295 = vld [vmem:[#allocation5 + $0x668] sm:$0xff]
    %v296 = vld [vmem:[#allocation5 + $0x670] sm:$0xff]
    %v297 = vld [vmem:[#allocation5 + $0x678] sm:$0xff]
    %v298 = vld [vmem:[#allocation5 + $0x680] sm:$0xff]
    %v299 = vld [vmem:[#allocation5 + $0x688] sm:$0xff]
    %v300 = vld [vmem:[#allocation5 + $0x690] sm:$0xff]
    %v301 = vld [vmem:[#allocation5 + $0x698] sm:$0xff]
    %v302 = vld [vmem:[#allocation5 + $0x6a0] sm:$0xff]
    %v303 = vld [vmem:[#allocation5 + $0x6a8] sm:$0xff]
    %v304 = vld [vmem:[#allocation5 + $0x6b0] sm:$0xff]
    %v305 = vld [vmem:[#allocation5 + $0x6b8] sm:$0xff]
    %v306 = vld [vmem:[#allocation5 + $0x6c0] sm:$0xff]
    %v307 = vld [vmem:[#allocation5 + $0x6c8] sm:$0xff]
    %v308 = vld [vmem:[#allocation5 + $0x6d0] sm:$0xff]
    %v309 = vld [vmem:[#allocation5 + $0x6d8] sm:$0xff]
    %v310 = vld [vmem:[#allocation5 + $0x6e0] sm:$0xff]
    %v311 = vld [vmem:[#allocation5 + $0x6e8] sm:$0xff]
    %v312 = vld [vmem:[#allocation5 + $0x6f0] sm:$0xff]
    %v313 = vld [vmem:[#allocation5 + $0x6f8] sm:$0xff]
    %v314 = vld [vmem:[#allocation5 + $0x700] sm:$0xff]
    %v315 = vld [vmem:[#allocation5 + $0x708] sm:$0xff]
    %v316 = vld [vmem:[#allocation5 + $0x710] sm:$0xff]
    %v317 = vld [vmem:[#allocation5 + $0x718] sm:$0xff]
    %v318 = vld [vmem:[#allocation5 + $0x720] sm:$0xff]
    %v319 = vld [vmem:[#allocation5 + $0x728] sm:$0xff]
    %v320 = vld [vmem:[#allocation5 + $0x730] sm:$0xff]
    %v321 = vld [vmem:[#allocation5 + $0x738] sm:$0xff]
    %v322 = vld [vmem:[#allocation5 + $0x740] sm:$0xff]
    %v323 = vld [vmem:[#allocation5 + $0x748] sm:$0xff]
    %v324 = vld [vmem:[#allocation5 + $0x750] sm:$0xff]
    %v325 = vld [vmem:[#allocation5 + $0x758] sm:$0xff]
    %v326 = vld [vmem:[#allocation5 + $0x760] sm:$0xff]
    %v327 = vld [vmem:[#allocation5 + $0x768] sm:$0xff]
    %v328 = vld [vmem:[#allocation5 + $0x770] sm:$0xff]
    %v329 = vld [vmem:[#allocation5 + $0x778] sm:$0xff]
    %v330 = vld [vmem:[#allocation5 + $0x780] sm:$0xff]
    %v331 = vld [vmem:[#allocation5 + $0x788] sm:$0xff]
    %v332 = vld [vmem:[#allocation5 + $0x790] sm:$0xff]
    %v333 = vld [vmem:[#allocation5 + $0x798] sm:$0xff]
    %v334 = vld [vmem:[#allocation5 + $0x7a0] sm:$0xff]
    %v335 = vld [vmem:[#allocation5 + $0x7a8] sm:$0xff]
    %v336 = vld [vmem:[#allocation5 + $0x7b0] sm:$0xff]
    %v337 = vld [vmem:[#allocation5 + $0x7b8] sm:$0xff]
    %v338 = vld [vmem:[#allocation5 + $0x7c0] sm:$0xff]
    %v339 = vld [vmem:[#allocation5 + $0x7c8] sm:$0xff]
    %v340 = vld [vmem:[#allocation5 + $0x7d0] sm:$0xff]
    %v341 = vld [vmem:[#allocation5 + $0x7d8] sm:$0xff]
    %v342 = vld [vmem:[#allocation5 + $0x7e0] sm:$0xff]
    %v343 = vld [vmem:[#allocation5 + $0x7e8] sm:$0xff]
    %v344 = vld [vmem:[#allocation5 + $0x7f0] sm:$0xff]
    %v345 = vld [vmem:[#allocation5 + $0x7f8] sm:$0xff]
    %v346 = vld [vmem:[#allocation5 + $0x800] sm:$0xff]
    %v347 = vld [vmem:[#allocation5 + $0x808] sm:$0xff]
    %v348 = vld [vmem:[#allocation5 + $0x810] sm:$0xff]
    %v349 = vld [vmem:[#allocation5 + $0x818] sm:$0xff]
    %v350 = vld [vmem:[#allocation5 + $0x820] sm:$0xff]
    %v351 = vld [vmem:[#allocation5 + $0x828] sm:$0xff]
    %v352 = vld [vmem:[#allocation5 + $0x830] sm:$0xff]
    %v353 = vld [vmem:[#allocation5 + $0x838] sm:$0xff]
    %v354 = vld [vmem:[#allocation5 + $0x840] sm:$0xff]
    %v355 = vld [vmem:[#allocation5 + $0x848] sm:$0xff]
    %v356 = vld [vmem:[#allocation5 + $0x850] sm:$0xff]
    %v357 = vld [vmem:[#allocation5 + $0x858] sm:$0xff]
    %v358 = vld [vmem:[#allocation5 + $0x860] sm:$0xff]
    %v359 = vld [vmem:[#allocation5 + $0x868] sm:$0xff]
    %v360 = vld [vmem:[#allocation5 + $0x870] sm:$0xff]
    %v361 = vld [vmem:[#allocation5 + $0x878] sm:$0xff]
    %v362 = vld [vmem:[#allocation5 + $0x880] sm:$0xff]
    %v363 = vld [vmem:[#allocation5 + $0x888] sm:$0xff]
    %v364 = vld [vmem:[#allocation5 + $0x890] sm:$0xff]
    %v365 = vld [vmem:[#allocation5 + $0x898] sm:$0xff]
    %v366 = vld [vmem:[#allocation5 + $0x8a0] sm:$0xff]
    %v367 = vld [vmem:[#allocation5 + $0x8a8] sm:$0xff]
    %v368 = vld [vmem:[#allocation5 + $0x8b0] sm:$0xff]
    %v369 = vld [vmem:[#allocation5 + $0x8b8] sm:$0xff]
    %v370 = vld [vmem:[#allocation5 + $0x8c0] sm:$0xff]
    %v371 = vld [vmem:[#allocation5 + $0x8c8] sm:$0xff]
    %v372 = vld [vmem:[#allocation5 + $0x8d0] sm:$0xff]
    %v373 = vld [vmem:[#allocation5 + $0x8d8] sm:$0xff]
    %v374 = vld [vmem:[#allocation5 + $0x8e0] sm:$0xff]
    %v375 = vld [vmem:[#allocation5 + $0x8e8] sm:$0xff]
    %v376 = vld [vmem:[#allocation5 + $0x8f0] sm:$0xff]
    %v377 = vld [vmem:[#allocation5 + $0x8f8] sm:$0xff]
    %v378 = vld [vmem:[#allocation5 + $0x900] sm:$0xff]
    %v379 = vld [vmem:[#allocation5 + $0x908] sm:$0xff]
    %v380 = vld [vmem:[#allocation5 + $0x910] sm:$0xff]
    %v381 = vld [vmem:[#allocation5 + $0x918] sm:$0xff]
    %v382 = vld [vmem:[#allocation5 + $0x920] sm:$0xff]
    %v383 = vld [vmem:[#allocation5 + $0x928] sm:$0xff]
    %v384 = vld [vmem:[#allocation5 + $0x930] sm:$0xff]
    %v385 = vld [vmem:[#allocation5 + $0x938] sm:$0xff]
    %v386 = vld [vmem:[#allocation5 + $0x940] sm:$0xff]
    %v387 = vld [vmem:[#allocation5 + $0x948] sm:$0xff]
    %v388 = vld [vmem:[#allocation5 + $0x950] sm:$0xff]
    %v389 = vld [vmem:[#allocation5 + $0x958] sm:$0xff]
    %v390 = vld [vmem:[#allocation5 + $0x960] sm:$0xff]
    %v391 = vld [vmem:[#allocation5 + $0x968] sm:$0xff]
    %v392 = vld [vmem:[#allocation5 + $0x970] sm:$0xff]
    %v393 = vld [vmem:[#allocation5 + $0x978] sm:$0xff]
    %v394 = vld [vmem:[#allocation5 + $0x980] sm:$0xff]
    %v395 = vld [vmem:[#allocation5 + $0x988] sm:$0xff]
    %v396 = vld [vmem:[#allocation5 + $0x990] sm:$0xff]
    %v397 = vld [vmem:[#allocation5 + $0x998] sm:$0xff]
    %v398 = vld [vmem:[#allocation5 + $0x9a0] sm:$0xff]
    %v399 = vld [vmem:[#allocation5 + $0x9a8] sm:$0xff]
    %v400 = vld [vmem:[#allocation5 + $0x9b0] sm:$0xff]
    %v401 = vld [vmem:[#allocation5 + $0x9b8] sm:$0xff]
    %v402 = vld [vmem:[#allocation5 + $0x9c0] sm:$0xff]
    %v403 = vld [vmem:[#allocation5 + $0x9c8] sm:$0xff]
    %v404 = vld [vmem:[#allocation5 + $0x9d0] sm:$0xff]
    %v405 = vld [vmem:[#allocation5 + $0x9d8] sm:$0xff]
    %v406 = vld [vmem:[#allocation5 + $0x9e0] sm:$0xff]
    %v407 = vld [vmem:[#allocation5 + $0x9e8] sm:$0xff]
    %v408 = vld [vmem:[#allocation5 + $0x9f0] sm:$0xff]
    %v409 = vld [vmem:[#allocation5 + $0x9f8] sm:$0xff]
    %v410 = vld [vmem:[#allocation5 + $0xa00] sm:$0xff]
    %v411 = vld [vmem:[#allocation5 + $0xa08] sm:$0xff]
    %v412 = vld [vmem:[#allocation5 + $0xa10] sm:$0xff]
    %v413 = vld [vmem:[#allocation5 + $0xa18] sm:$0xff]
    %v414 = vld [vmem:[#allocation5 + $0xa20] sm:$0xff]
    %v415 = vld [vmem:[#allocation5 + $0xa28] sm:$0xff]
    %v416 = vld [vmem:[#allocation5 + $0xa30] sm:$0xff]
    %v417 = vld [vmem:[#allocation5 + $0xa38] sm:$0xff]
    %v418 = vld [vmem:[#allocation5 + $0xa40] sm:$0xff]
    %v419 = vld [vmem:[#allocation5 + $0xa48] sm:$0xff]
    %v420 = vld [vmem:[#allocation5 + $0xa50] sm:$0xff]
    %v421 = vld [vmem:[#allocation5 + $0xa58] sm:$0xff]
    %v422 = vld [vmem:[#allocation5 + $0xa60] sm:$0xff]
    %v423 = vld [vmem:[#allocation5 + $0xa68] sm:$0xff]
    %v424 = vld [vmem:[#allocation5 + $0xa70] sm:$0xff]
    %v425 = vld [vmem:[#allocation5 + $0xa78] sm:$0xff]
    %v426 = vld [vmem:[#allocation5 + $0xa80] sm:$0xff]
    %v427 = vld [vmem:[#allocation5 + $0xa88] sm:$0xff]
    %v428 = vld [vmem:[#allocation5 + $0xa90] sm:$0xff]
    %v429 = vld [vmem:[#allocation5 + $0xa98] sm:$0xff]
    %v430 = vld [vmem:[#allocation5 + $0xaa0] sm:$0xff]
    %v431 = vld [vmem:[#allocation5 + $0xaa8] sm:$0xff]
    %v432 = vld [vmem:[#allocation5 + $0xab0] sm:$0xff]
    %v433 = vld [vmem:[#allocation5 + $0xab8] sm:$0xff]
    %v434 = vld [vmem:[#allocation5 + $0xac0] sm:$0xff]
    %v435 = vld [vmem:[#allocation5 + $0xac8] sm:$0xff]
    %v436 = vld [vmem:[#allocation5 + $0xad0] sm:$0xff]
    %v437 = vld [vmem:[#allocation5 + $0xad8] sm:$0xff]
    %v438 = vld [vmem:[#allocation5 + $0xae0] sm:$0xff]
    %v439 = vld [vmem:[#allocation5 + $0xae8] sm:$0xff]
    %v440 = vld [vmem:[#allocation5 + $0xaf0] sm:$0xff]
    %v441 = vld [vmem:[#allocation5 + $0xaf8] sm:$0xff]
    %v442 = vld [vmem:[#allocation5 + $0xb00] sm:$0xff]
    %v443 = vld [vmem:[#allocation5 + $0xb08] sm:$0xff]
    %v444 = vld [vmem:[#allocation5 + $0xb10] sm:$0xff]
    %v445 = vld [vmem:[#allocation5 + $0xb18] sm:$0xff]
    %v446 = vld [vmem:[#allocation5 + $0xb20] sm:$0xff]
    %v447 = vld [vmem:[#allocation5 + $0xb28] sm:$0xff]
    %v448 = vld [vmem:[#allocation5 + $0xb30] sm:$0xff]
    %v449 = vld [vmem:[#allocation5 + $0xb38] sm:$0xff]
    %v450 = vld [vmem:[#allocation5 + $0xb40] sm:$0xff]
    %v451 = vld [vmem:[#allocation5 + $0xb48] sm:$0xff]
    %v452 = vld [vmem:[#allocation5 + $0xb50] sm:$0xff]
    %v453 = vld [vmem:[#allocation5 + $0xb58] sm:$0xff]
    %v454 = vld [vmem:[#allocation5 + $0xb60] sm:$0xff]
    %v455 = vld [vmem:[#allocation5 + $0xb68] sm:$0xff]
    %v456 = vld [vmem:[#allocation5 + $0xb70] sm:$0xff]
    %v457 = vld [vmem:[#allocation5 + $0xb78] sm:$0xff]
    %v458 = vld [vmem:[#allocation5 + $0xb80] sm:$0xff]
    %v459 = vld [vmem:[#allocation5 + $0xb88] sm:$0xff]
    %v460 = vld [vmem:[#allocation5 + $0xb90] sm:$0xff]
    %v461 = vld [vmem:[#allocation5 + $0xb98] sm:$0xff]
    %v462 = vld [vmem:[#allocation5 + $0xba0] sm:$0xff]
    %v463 = vld [vmem:[#allocation5 + $0xba8] sm:$0xff]
    %v464 = vld [vmem:[#allocation5 + $0xbb0] sm:$0xff]
    %v465 = vld [vmem:[#allocation5 + $0xbb8] sm:$0xff]
    %v466 = vld [vmem:[#allocation5 + $0xbc0] sm:$0xff]
    %v467 = vld [vmem:[#allocation5 + $0xbc8] sm:$0xff]
    %v468 = vld [vmem:[#allocation5 + $0xbd0] sm:$0xff]
    %v469 = vld [vmem:[#allocation5 + $0xbd8] sm:$0xff]
    %v470 = vld [vmem:[#allocation5 + $0xbe0] sm:$0xff]
    %v471 = vld [vmem:[#allocation5 + $0xbe8] sm:$0xff]
    %v472 = vld [vmem:[#allocation5 + $0xbf0] sm:$0xff]
    %v473 = vld [vmem:[#allocation5 + $0xbf8] sm:$0xff]
    %v474 = vld [vmem:[#allocation5 + $0xc00] sm:$0xff]
    %v475 = vld [vmem:[#allocation5 + $0xc08] sm:$0xff]
    %v476 = vld [vmem:[#allocation5 + $0xc10] sm:$0xff]
    %v477 = vld [vmem:[#allocation5 + $0xc18] sm:$0xff]
    %v478 = vld [vmem:[#allocation5 + $0xc20] sm:$0xff]
    %v479 = vld [vmem:[#allocation5 + $0xc28] sm:$0xff]
    %v480 = vld [vmem:[#allocation5 + $0xc30] sm:$0xff]
    %v481 = vld [vmem:[#allocation5 + $0xc38] sm:$0xff]
    %v482 = vld [vmem:[#allocation7] sm:$0xf]
    %v484 = vlaneseq
    %v485 = vshrl.u32 %v484, 7
    %v486 = vsub.s32 0, %v485
    %v487 = vrot.slane %v482, %v486
    %v488 = vlaneseq
    %v489 = vshrl.u32 %v488, 7
    %v490 = vsub.s32 1, %v489
    %v491 = vrot.slane %v482, %v490
    %v492 = vlaneseq
    %v493 = vshrl.u32 %v492, 7
    %v494 = vsub.s32 2, %v493
    %v495 = vrot.slane %v482, %v494
    %v496 = vlaneseq
    %v497 = vshrl.u32 %v496, 7
    %v498 = vsub.s32 3, %v497
    %v499 = vrot.slane %v482, %v498
    %vm504 = vcmask 130048
    %v506 = vsel %vm504, %v89, 0
    %508 = vmatprep.subr.mxu0 %v91
    %509 = vmatpush1.msra.mxu0 %v90
    %510 = vmatprep.subr.mxu0 %v95
    %511 = vmatpush1.msra.mxu0 %v94
    %512 = vmatprep.subr.mxu0 %v99
    %513 = vmatpush1.msra.mxu0 %v98
    %514 = vmatprep.subr.mxu0 %v103
    %515 = vmatpush1.msra.mxu0 %v102
    %516 = vmatprep.subr.mxu0 %v107
    %517 = vmatpush1.msra.mxu0 %v106
    %518 = vmatprep.subr.mxu0 %v111
    %519 = vmatpush1.msra.mxu0 %v110
    %520 = vmatprep.subr.mxu0 %v115
    %521 = vmatpush1.msra.mxu0 %v114
    %522 = vmatprep.subr.mxu0 %v119
    %523 = vmatpush1.msra.mxu0 %v118
    %524 = vmatprep.subr.mxu0 %v123
    %525 = vmatpush1.msra.mxu0 %v122
    %526 = vmatprep.subr.mxu0 %v127
    %527 = vmatpush1.msra.mxu0 %v126
    %528 = vmatprep.subr.mxu0 %v131
    %529 = vmatpush1.msra.mxu0 %v130
    %530 = vmatprep.subr.mxu0 %v135
    %531 = vmatpush1.msra.mxu0 %v134
    %532 = vmatprep.subr.mxu0 %v139
    %533 = vmatpush1.msra.mxu0 %v138
    %534 = vmatprep.subr.mxu0 %v143
    %535 = vmatpush1.msra.mxu0 %v142
    %536 = vmatprep.subr.mxu0 %v147
    %537 = vmatpush1.msra.mxu0 %v146
    %538 = vmatprep.subr.mxu0 %v151
    %539 = vmatpush1.msra.mxu0 %v150
    %540 = vmatprep.subr.mxu0 %v155
    %541 = vmatpush1.msra.mxu0 %v154
    %542 = vmatprep.subr.mxu0 %v159
    %543 = vmatpush1.msra.mxu0 %v158
    %544 = vmatprep.subr.mxu0 %v163
    %545 = vmatpush1.msra.mxu0 %v162
    %546 = vmatprep.subr.mxu0 %v167
    %547 = vmatpush1.msra.mxu0 %v166
    %548 = vmatprep.subr.mxu0 %v171
    %549 = vmatpush1.msra.mxu0 %v170
    %550 = vmatprep.subr.mxu0 %v175
    %551 = vmatpush1.msra.mxu0 %v174
    %552 = vmatprep.subr.mxu0 %v179
    %553 = vmatpush1.msra.mxu0 %v178
    %554 = vmatprep.subr.mxu0 %v183
    %555 = vmatpush1.msra.mxu0 %v182
    %556 = vmatprep.subr.mxu0 %v187
    %557 = vmatpush1.msra.mxu0 %v186
    %558 = vmatprep.subr.mxu0 %v191
    %559 = vmatpush1.msra.mxu0 %v190
    %560 = vmatprep.subr.mxu0 %v195
    %561 = vmatpush1.msra.mxu0 %v194
    %562 = vmatprep.subr.mxu0 %v199
    %563 = vmatpush1.msra.mxu0 %v198
    %564 = vmatprep.subr.mxu0 %v203
    %565 = vmatpush1.msra.mxu0 %v202
    %566 = vmatprep.subr.mxu0 %v207
    %567 = vmatpush1.msra.mxu0 %v206
    %568 = vmatprep.subr.mxu0 %v211
    %569 = vmatpush1.msra.mxu0 %v210
    %570 = vmatprep.subr.mxu0 %v215
    %571 = vmatpush1.msra.mxu0 %v214
    %572 = vmatprep.mubr.f32.mxu0 %v84
    %573 = vmatmul.mubr.f32.gmra.mrb[0].mxu0 %v83
    %v574 = vpop.f32.mrb[0].mxu0
    %v575 = vadd.f32 %v487, %v574
    %v576 = vpop.f32.mrb[0].mxu0
    %v577 = vadd.f32 %v491, %v576
    %578 = vdwg.mxu0
    %579 = vmatprep.subr.mxu0 %v219
    %580 = vmatpush1.msra.mxu0 %v218
    %581 = vmatprep.subr.mxu0 %v223
    %582 = vmatpush1.msra.mxu0 %v222
    %583 = vmatprep.subr.mxu0 %v227
    %584 = vmatpush1.msra.mxu0 %v226
    %585 = vmatprep.subr.mxu0 %v231
    %586 = vmatpush1.msra.mxu0 %v230
    %587 = vmatprep.subr.mxu0 %v235
    %588 = vmatpush1.msra.mxu0 %v234
    %589 = vmatprep.subr.mxu0 %v239
    %590 = vmatpush1.msra.mxu0 %v238
    %591 = vmatprep.subr.mxu0 %v243
    %592 = vmatpush1.msra.mxu0 %v242
    %593 = vmatprep.subr.mxu0 %v247
    %594 = vmatpush1.msra.mxu0 %v246
    %595 = vmatprep.subr.mxu0 %v251
    %596 = vmatpush1.msra.mxu0 %v250
    %597 = vmatprep.subr.mxu0 %v255
    %598 = vmatpush1.msra.mxu0 %v254
    %599 = vmatprep.subr.mxu0 %v259
    %600 = vmatpush1.msra.mxu0 %v258
    %601 = vmatprep.subr.mxu0 %v263
    %602 = vmatpush1.msra.mxu0 %v262
    %603 = vmatprep.subr.mxu0 %v267
    %604 = vmatpush1.msra.mxu0 %v266
    %605 = vmatprep.subr.mxu0 %v271
    %606 = vmatpush1.msra.mxu0 %v270
    %607 = vmatprep.subr.mxu0 %v275
    %608 = vmatpush1.msra.mxu0 %v274
    %609 = vmatprep.subr.mxu0 %v279
    %610 = vmatpush1.msra.mxu0 %v278
    %611 = vmatprep.subr.mxu0 %v283
    %612 = vmatpush1.msra.mxu0 %v282
    %613 = vmatprep.subr.mxu0 %v287
    %614 = vmatpush1.msra.mxu0 %v286
    %615 = vmatprep.subr.mxu0 %v291
    %616 = vmatpush1.msra.mxu0 %v290
    %617 = vmatprep.subr.mxu0 %v295
    %618 = vmatpush1.msra.mxu0 %v294
    %619 = vmatprep.subr.mxu0 %v299
    %620 = vmatpush1.msra.mxu0 %v298
    %621 = vmatprep.subr.mxu0 %v303
    %622 = vmatpush1.msra.mxu0 %v302
    %623 = vmatprep.subr.mxu0 %v307
    %624 = vmatpush1.msra.mxu0 %v306
    %625 = vmatprep.subr.mxu0 %v311
    %626 = vmatpush1.msra.mxu0 %v310
    %627 = vmatprep.subr.mxu0 %v315
    %628 = vmatpush1.msra.mxu0 %v314
    %629 = vmatprep.subr.mxu0 %v319
    %630 = vmatpush1.msra.mxu0 %v318
    %631 = vmatprep.subr.mxu0 %v323
    %632 = vmatpush1.msra.mxu0 %v322
    %633 = vmatprep.subr.mxu0 %v327
    %634 = vmatpush1.msra.mxu0 %v326
    %635 = vmatprep.subr.mxu0 %v331
    %636 = vmatpush1.msra.mxu0 %v330
    %637 = vmatprep.subr.mxu0 %v335
    %638 = vmatpush1.msra.mxu0 %v334
    %639 = vmatprep.subr.mxu0 %v339
    %640 = vmatpush1.msra.mxu0 %v338
    %641 = vmatprep.subr.mxu0 %v343
    %642 = vmatpush1.msra.mxu0 %v342
    %643 = vmatprep.mubr.f32.mxu0 %v86
    %644 = vmatmul.mubr.f32.gmra.mrb[0].mxu0 %v85
    %v645 = vpop.f32.mrb[0].mxu0
    %v646 = vadd.f32 %v575, %v645
    %v647 = vpop.f32.mrb[0].mxu0
    %v648 = vadd.f32 %v577, %v647
    %649 = vdwg.mxu0
    %650 = vmatprep.subr.mxu0 %v347
    %651 = vmatpush1.msra.mxu0 %v346
    %652 = vmatprep.subr.mxu0 %v351
    %653 = vmatpush1.msra.mxu0 %v350
    %654 = vmatprep.subr.mxu0 %v355
    %655 = vmatpush1.msra.mxu0 %v354
    %656 = vmatprep.subr.mxu0 %v359
    %657 = vmatpush1.msra.mxu0 %v358
    %658 = vmatprep.subr.mxu0 %v363
    %659 = vmatpush1.msra.mxu0 %v362
    %660 = vmatprep.subr.mxu0 %v367
    %661 = vmatpush1.msra.mxu0 %v366
    %662 = vmatprep.subr.mxu0 %v371
    %663 = vmatpush1.msra.mxu0 %v370
    %664 = vmatprep.subr.mxu0 %v375
    %665 = vmatpush1.msra.mxu0 %v374
    %666 = vmatprep.subr.mxu0 %v379
    %667 = vmatpush1.msra.mxu0 %v378
    %668 = vmatprep.subr.mxu0 %v383
    %669 = vmatpush1.msra.mxu0 %v382
    %670 = vmatprep.subr.mxu0 %v387
    %671 = vmatpush1.msra.mxu0 %v386
    %672 = vmatprep.subr.mxu0 %v391
    %673 = vmatpush1.msra.mxu0 %v390
    %674 = vmatprep.subr.mxu0 %v395
    %675 = vmatpush1.msra.mxu0 %v394
    %676 = vmatprep.subr.mxu0 %v399
    %677 = vmatpush1.msra.mxu0 %v398
    %678 = vmatprep.subr.mxu0 %v403
    %679 = vmatpush1.msra.mxu0 %v402
    %680 = vmatprep.subr.mxu0 %v407
    %681 = vmatpush1.msra.mxu0 %v406
    %682 = vmatprep.subr.mxu0 %v411
    %683 = vmatpush1.msra.mxu0 %v410
    %684 = vmatprep.subr.mxu0 %v415
    %685 = vmatpush1.msra.mxu0 %v414
    %686 = vmatprep.subr.mxu0 %v419
    %687 = vmatpush1.msra.mxu0 %v418
    %688 = vmatprep.subr.mxu0 %v423
    %689 = vmatpush1.msra.mxu0 %v422
    %690 = vmatprep.subr.mxu0 %v427
    %691 = vmatpush1.msra.mxu0 %v426
    %692 = vmatprep.subr.mxu0 %v431
    %693 = vmatpush1.msra.mxu0 %v430
    %694 = vmatprep.subr.mxu0 %v435
    %695 = vmatpush1.msra.mxu0 %v434
    %696 = vmatprep.subr.mxu0 %v439
    %697 = vmatpush1.msra.mxu0 %v438
    %698 = vmatprep.subr.mxu0 %v443
    %699 = vmatpush1.msra.mxu0 %v442
    %700 = vmatprep.subr.mxu0 %v447
    %701 = vmatpush1.msra.mxu0 %v446
    %702 = vmatprep.subr.mxu0 %v451
    %703 = vmatpush1.msra.mxu0 %v450
    %704 = vmatprep.subr.mxu0 %v455
    %705 = vmatpush1.msra.mxu0 %v454
    %706 = vmatprep.subr.mxu0 %v459
    %707 = vmatpush1.msra.mxu0 %v458
    %708 = vmatprep.subr.mxu0 %v463
    %709 = vmatpush1.msra.mxu0 %v462
    %710 = vmatprep.subr.mxu0 %v467
    %711 = vmatpush1.msra.mxu0 %v466
    %712 = vmatprep.subr.mxu0 %v471
    %713 = vmatpush1.msra.mxu0 %v470
    %714 = vmatprep.mubr.f32.mxu0 %v88
    %715 = vmatmul.mubr.f32.gmra.mrb[0].mxu0 %v87
    %v716 = vpop.f32.mrb[0].mxu0
    %v717 = vadd.f32 %v646, %v716
    %v718 = vpop.f32.mrb[0].mxu0
    %v719 = vadd.f32 %v648, %v718
    %720 = vdwg.mxu0
    %721 = vmatprep.subr.mxu0 %v475
    %722 = vmatpush1.msra.mxu0 %v474
    %723 = vmatprep.subr.mxu0 %v479
    %724 = vmatpush1.msra.mxu0 %v478
    %725 = vmatprep.subr.mxu0 0.0
    %726 = vmatpush1.msra.mxu0 0.0
    %727 = vmatprep.subr.mxu0 0.0
    %728 = vmatpush1.msra.mxu0 0.0
    %729 = vmatprep.subr.mxu0 0.0
    %730 = vmatpush1.msra.mxu0 0.0
    %731 = vmatprep.subr.mxu0 0.0
    %732 = vmatpush1.msra.mxu0 0.0
    %733 = vmatprep.subr.mxu0 0.0
    %734 = vmatpush1.msra.mxu0 0.0
    %735 = vmatprep.subr.mxu0 0.0
    %736 = vmatpush1.msra.mxu0 0.0
    %737 = vmatprep.subr.mxu0 0.0
    %738 = vmatpush1.msra.mxu0 0.0
    %739 = vmatprep.subr.mxu0 0.0
    %740 = vmatpush1.msra.mxu0 0.0
    %741 = vmatprep.subr.mxu0 0.0
    %742 = vmatpush1.msra.mxu0 0.0
    %743 = vmatprep.subr.mxu0 0.0
    %744 = vmatpush1.msra.mxu0 0.0
    %745 = vmatprep.subr.mxu0 0.0
    %746 = vmatpush1.msra.mxu0 0.0
    %747 = vmatprep.subr.mxu0 0.0
    %748 = vmatpush1.msra.mxu0 0.0
    %749 = vmatprep.subr.mxu0 0.0
    %750 = vmatpush1.msra.mxu0 0.0
    %751 = vmatprep.subr.mxu0 0.0
    %752 = vmatpush1.msra.mxu0 0.0
    %753 = vmatprep.subr.mxu0 0.0
    %754 = vmatpush1.msra.mxu0 0.0
    %755 = vmatprep.subr.mxu0 0.0
    %756 = vmatpush1.msra.mxu0 0.0
    %757 = vmatprep.subr.mxu0 0.0
    %758 = vmatpush1.msra.mxu0 0.0
    %759 = vmatprep.subr.mxu0 0.0
    %760 = vmatpush1.msra.mxu0 0.0
    %761 = vmatprep.subr.mxu0 0.0
    %762 = vmatpush1.msra.mxu0 0.0
    %763 = vmatprep.subr.mxu0 0.0
    %764 = vmatpush1.msra.mxu0 0.0
    %765 = vmatprep.subr.mxu0 0.0
    %766 = vmatpush1.msra.mxu0 0.0
    %767 = vmatprep.subr.mxu0 0.0
    %768 = vmatpush1.msra.mxu0 0.0
    %769 = vmatprep.subr.mxu0 0.0
    %770 = vmatpush1.msra.mxu0 0.0
    %771 = vmatprep.subr.mxu0 0.0
    %772 = vmatpush1.msra.mxu0 0.0
    %773 = vmatprep.subr.mxu0 0.0
    %774 = vmatpush1.msra.mxu0 0.0
    %775 = vmatprep.subr.mxu0 0.0
    %776 = vmatpush1.msra.mxu0 0.0
    %777 = vmatprep.subr.mxu0 0.0
    %778 = vmatpush1.msra.mxu0 0.0
    %779 = vmatprep.subr.mxu0 0.0
    %780 = vmatpush1.msra.mxu0 0.0
    %781 = vmatprep.subr.mxu0 0.0
    %782 = vmatpush1.msra.mxu0 0.0
    %783 = vmatprep.subr.mxu0 0.0
    %784 = vmatpush1.msra.mxu0 0.0
    %785 = vmatprep.mubr.f32.mxu0 0.0
    %786 = vmatmul.mubr.f32.gmra.mrb[0].mxu0 %v506
    %v787 = vpop.f32.mrb[0].mxu0
    %v788 = vadd.f32 %v717, %v787
    %v789 = vpop.f32.mrb[0].mxu0
    %v790 = vadd.f32 %v719, %v789
    %791 = vdwg.mxu0
    %792 = vmatprep.subr.mxu0 %v93
    %793 = vmatpush1.msra.mxu0 %v92
    %794 = vmatprep.subr.mxu0 %v97
    %795 = vmatpush1.msra.mxu0 %v96
    %796 = vmatprep.subr.mxu0 %v101
    %797 = vmatpush1.msra.mxu0 %v100
    %798 = vmatprep.subr.mxu0 %v105
    %799 = vmatpush1.msra.mxu0 %v104
    %800 = vmatprep.subr.mxu0 %v109
    %801 = vmatpush1.msra.mxu0 %v108
    %802 = vmatprep.subr.mxu0 %v113
    %803 = vmatpush1.msra.mxu0 %v112
    %804 = vmatprep.subr.mxu0 %v117
    %805 = vmatpush1.msra.mxu0 %v116
    %806 = vmatprep.subr.mxu0 %v121
    %807 = vmatpush1.msra.mxu0 %v120
    %808 = vmatprep.subr.mxu0 %v125
    %809 = vmatpush1.msra.mxu0 %v124
    %810 = vmatprep.subr.mxu0 %v129
    %811 = vmatpush1.msra.mxu0 %v128
    %812 = vmatprep.subr.mxu0 %v133
    %813 = vmatpush1.msra.mxu0 %v132
    %814 = vmatprep.subr.mxu0 %v137
    %815 = vmatpush1.msra.mxu0 %v136
    %816 = vmatprep.subr.mxu0 %v141
    %817 = vmatpush1.msra.mxu0 %v140
    %818 = vmatprep.subr.mxu0 %v145
    %819 = vmatpush1.msra.mxu0 %v144
    %820 = vmatprep.subr.mxu0 %v149
    %821 = vmatpush1.msra.mxu0 %v148
    %822 = vmatprep.subr.mxu0 %v153
    %823 = vmatpush1.msra.mxu0 %v152
    %824 = vmatprep.subr.mxu0 %v157
    %825 = vmatpush1.msra.mxu0 %v156
    %826 = vmatprep.subr.mxu0 %v161
    %827 = vmatpush1.msra.mxu0 %v160
    %828 = vmatprep.subr.mxu0 %v165
    %829 = vmatpush1.msra.mxu0 %v164
    %830 = vmatprep.subr.mxu0 %v169
    %831 = vmatpush1.msra.mxu0 %v168
    %832 = vmatprep.subr.mxu0 %v173
    %833 = vmatpush1.msra.mxu0 %v172
    %834 = vmatprep.subr.mxu0 %v177
    %835 = vmatpush1.msra.mxu0 %v176
    %836 = vmatprep.subr.mxu0 %v181
    %837 = vmatpush1.msra.mxu0 %v180
    %838 = vmatprep.subr.mxu0 %v185
    %839 = vmatpush1.msra.mxu0 %v184
    %840 = vmatprep.subr.mxu0 %v189
    %841 = vmatpush1.msra.mxu0 %v188
    %842 = vmatprep.subr.mxu0 %v193
    %843 = vmatpush1.msra.mxu0 %v192
    %844 = vmatprep.subr.mxu0 %v197
    %845 = vmatpush1.msra.mxu0 %v196
    %846 = vmatprep.subr.mxu0 %v201
    %847 = vmatpush1.msra.mxu0 %v200
    %848 = vmatprep.subr.mxu0 %v205
    %849 = vmatpush1.msra.mxu0 %v204
    %850 = vmatprep.subr.mxu0 %v209
    %851 = vmatpush1.msra.mxu0 %v208
    %852 = vmatprep.subr.mxu0 %v213
    %853 = vmatpush1.msra.mxu0 %v212
    %854 = vmatprep.subr.mxu0 %v217
    %855 = vmatpush1.msra.mxu0 %v216
    %856 = vmatprep.mubr.f32.mxu0 %v84
    %857 = vmatmul.mubr.f32.gmra.mrb[0].mxu0 %v83
    %v858 = vpop.f32.mrb[0].mxu0
    %v859 = vadd.f32 %v495, %v858
    %v860 = vpop.f32.mrb[0].mxu0
    %v861 = vadd.f32 %v499, %v860
    %862 = vdwg.mxu0
    %863 = vmatprep.subr.mxu0 %v221
    %864 = vmatpush1.msra.mxu0 %v220
    %865 = vmatprep.subr.mxu0 %v225
    %866 = vmatpush1.msra.mxu0 %v224
    %867 = vmatprep.subr.mxu0 %v229
    %868 = vmatpush1.msra.mxu0 %v228
    %869 = vmatprep.subr.mxu0 %v233
    %870 = vmatpush1.msra.mxu0 %v232
    %871 = vmatprep.subr.mxu0 %v237
    %872 = vmatpush1.msra.mxu0 %v236
    %873 = vmatprep.subr.mxu0 %v241
    %874 = vmatpush1.msra.mxu0 %v240
    %875 = vmatprep.subr.mxu0 %v245
    %876 = vmatpush1.msra.mxu0 %v244
    %877 = vmatprep.subr.mxu0 %v249
    %878 = vmatpush1.msra.mxu0 %v248
    %879 = vmatprep.subr.mxu0 %v253
    %880 = vmatpush1.msra.mxu0 %v252
    %881 = vmatprep.subr.mxu0 %v257
    %882 = vmatpush1.msra.mxu0 %v256
    %883 = vmatprep.subr.mxu0 %v261
    %884 = vmatpush1.msra.mxu0 %v260
    %885 = vmatprep.subr.mxu0 %v265
    %886 = vmatpush1.msra.mxu0 %v264
    %887 = vmatprep.subr.mxu0 %v269
    %888 = vmatpush1.msra.mxu0 %v268
    %889 = vmatprep.subr.mxu0 %v273
    %890 = vmatpush1.msra.mxu0 %v272
    %891 = vmatprep.subr.mxu0 %v277
    %892 = vmatpush1.msra.mxu0 %v276
    %893 = vmatprep.subr.mxu0 %v281
    %894 = vmatpush1.msra.mxu0 %v280
    %895 = vmatprep.subr.mxu0 %v285
    %896 = vmatpush1.msra.mxu0 %v284
    %897 = vmatprep.subr.mxu0 %v289
    %898 = vmatpush1.msra.mxu0 %v288
    %899 = vmatprep.subr.mxu0 %v293
    %900 = vmatpush1.msra.mxu0 %v292
    %901 = vmatprep.subr.mxu0 %v297
    %902 = vmatpush1.msra.mxu0 %v296
    %903 = vmatprep.subr.mxu0 %v301
    %904 = vmatpush1.msra.mxu0 %v300
    %905 = vmatprep.subr.mxu0 %v305
    %906 = vmatpush1.msra.mxu0 %v304
    %907 = vmatprep.subr.mxu0 %v309
    %908 = vmatpush1.msra.mxu0 %v308
    %909 = vmatprep.subr.mxu0 %v313
    %910 = vmatpush1.msra.mxu0 %v312
    %911 = vmatprep.subr.mxu0 %v317
    %912 = vmatpush1.msra.mxu0 %v316
    %913 = vmatprep.subr.mxu0 %v321
    %914 = vmatpush1.msra.mxu0 %v320
    %915 = vmatprep.subr.mxu0 %v325
    %916 = vmatpush1.msra.mxu0 %v324
    %917 = vmatprep.subr.mxu0 %v329
    %918 = vmatpush1.msra.mxu0 %v328
    %919 = vmatprep.subr.mxu0 %v333
    %920 = vmatpush1.msra.mxu0 %v332
    %921 = vmatprep.subr.mxu0 %v337
    %922 = vmatpush1.msra.mxu0 %v336
    %923 = vmatprep.subr.mxu0 %v341
    %924 = vmatpush1.msra.mxu0 %v340
    %925 = vmatprep.subr.mxu0 %v345
    %926 = vmatpush1.msra.mxu0 %v344
    %927 = vmatprep.mubr.f32.mxu0 %v86
    %928 = vmatmul.mubr.f32.gmra.mrb[0].mxu0 %v85
    %v929 = vpop.f32.mrb[0].mxu0
    %v930 = vadd.f32 %v859, %v929
    %v931 = vpop.f32.mrb[0].mxu0
    %v932 = vadd.f32 %v861, %v931
    %933 = vdwg.mxu0
    %934 = vmatprep.subr.mxu0 %v349
    %935 = vmatpush1.msra.mxu0 %v348
    %936 = vmatprep.subr.mxu0 %v353
    %937 = vmatpush1.msra.mxu0 %v352
    %938 = vmatprep.subr.mxu0 %v357
    %939 = vmatpush1.msra.mxu0 %v356
    %940 = vmatprep.subr.mxu0 %v361
    %941 = vmatpush1.msra.mxu0 %v360
    %942 = vmatprep.subr.mxu0 %v365
    %943 = vmatpush1.msra.mxu0 %v364
    %944 = vmatprep.subr.mxu0 %v369
    %945 = vmatpush1.msra.mxu0 %v368
    %946 = vmatprep.subr.mxu0 %v373
    %947 = vmatpush1.msra.mxu0 %v372
    %948 = vmatprep.subr.mxu0 %v377
    %949 = vmatpush1.msra.mxu0 %v376
    %950 = vmatprep.subr.mxu0 %v381
    %951 = vmatpush1.msra.mxu0 %v380
    %952 = vmatprep.subr.mxu0 %v385
    %953 = vmatpush1.msra.mxu0 %v384
    %954 = vmatprep.subr.mxu0 %v389
    %955 = vmatpush1.msra.mxu0 %v388
    %956 = vmatprep.subr.mxu0 %v393
    %957 = vmatpush1.msra.mxu0 %v392
    %958 = vmatprep.subr.mxu0 %v397
    %959 = vmatpush1.msra.mxu0 %v396
    %960 = vmatprep.subr.mxu0 %v401
    %961 = vmatpush1.msra.mxu0 %v400
    %962 = vmatprep.subr.mxu0 %v405
    %963 = vmatpush1.msra.mxu0 %v404
    %964 = vmatprep.subr.mxu0 %v409
    %965 = vmatpush1.msra.mxu0 %v408
    %966 = vmatprep.subr.mxu0 %v413
    %967 = vmatpush1.msra.mxu0 %v412
    %968 = vmatprep.subr.mxu0 %v417
    %969 = vmatpush1.msra.mxu0 %v416
    %970 = vmatprep.subr.mxu0 %v421
    %971 = vmatpush1.msra.mxu0 %v420
    %972 = vmatprep.subr.mxu0 %v425
    %973 = vmatpush1.msra.mxu0 %v424
    %974 = vmatprep.subr.mxu0 %v429
    %975 = vmatpush1.msra.mxu0 %v428
    %976 = vmatprep.subr.mxu0 %v433
    %977 = vmatpush1.msra.mxu0 %v432
    %978 = vmatprep.subr.mxu0 %v437
    %979 = vmatpush1.msra.mxu0 %v436
    %980 = vmatprep.subr.mxu0 %v441
    %981 = vmatpush1.msra.mxu0 %v440
    %982 = vmatprep.subr.mxu0 %v445
    %983 = vmatpush1.msra.mxu0 %v444
    %984 = vmatprep.subr.mxu0 %v449
    %985 = vmatpush1.msra.mxu0 %v448
    %986 = vmatprep.subr.mxu0 %v453
    %987 = vmatpush1.msra.mxu0 %v452
    %988 = vmatprep.subr.mxu0 %v457
    %989 = vmatpush1.msra.mxu0 %v456
    %990 = vmatprep.subr.mxu0 %v461
    %991 = vmatpush1.msra.mxu0 %v460
    %992 = vmatprep.subr.mxu0 %v465
    %993 = vmatpush1.msra.mxu0 %v464
    %994 = vmatprep.subr.mxu0 %v469
    %995 = vmatpush1.msra.mxu0 %v468
    %996 = vmatprep.subr.mxu0 %v473
    %997 = vmatpush1.msra.mxu0 %v472
    %998 = vmatprep.mubr.f32.mxu0 %v88
    %999 = vmatmul.mubr.f32.gmra.mrb[0].mxu0 %v87
    %v1000 = vpop.f32.mrb[0].mxu0
    %v1001 = vadd.f32 %v930, %v1000
    %v1002 = vpop.f32.mrb[0].mxu0
    %v1003 = vadd.f32 %v932, %v1002
    %1004 = vdwg.mxu0
    %1005 = vmatprep.subr.mxu0 %v477
    %1006 = vmatpush1.msra.mxu0 %v476
    %1007 = vmatprep.subr.mxu0 %v481
    %1008 = vmatpush1.msra.mxu0 %v480
    %1009 = vmatprep.subr.mxu0 0.0
    %1010 = vmatpush1.msra.mxu0 0.0
    %1011 = vmatprep.subr.mxu0 0.0
    %1012 = vmatpush1.msra.mxu0 0.0
    %1013 = vmatprep.subr.mxu0 0.0
    %1014 = vmatpush1.msra.mxu0 0.0
    %1015 = vmatprep.subr.mxu0 0.0
    %1016 = vmatpush1.msra.mxu0 0.0
    %1017 = vmatprep.subr.mxu0 0.0
    %1018 = vmatpush1.msra.mxu0 0.0
    %1019 = vmatprep.subr.mxu0 0.0
    %1020 = vmatpush1.msra.mxu0 0.0
    %1021 = vmatprep.subr.mxu0 0.0
    %1022 = vmatpush1.msra.mxu0 0.0
    %1023 = vmatprep.subr.mxu0 0.0
    %1024 = vmatpush1.msra.mxu0 0.0
    %1025 = vmatprep.subr.mxu0 0.0
    %1026 = vmatpush1.msra.mxu0 0.0
    %1027 = vmatprep.subr.mxu0 0.0
    %1028 = vmatpush1.msra.mxu0 0.0
    %1029 = vmatprep.subr.mxu0 0.0
    %1030 = vmatpush1.msra.mxu0 0.0
    %1031 = vmatprep.subr.mxu0 0.0
    %1032 = vmatpush1.msra.mxu0 0.0
    %1033 = vmatprep.subr.mxu0 0.0
    %1034 = vmatpush1.msra.mxu0 0.0
    %1035 = vmatprep.subr.mxu0 0.0
    %1036 = vmatpush1.msra.mxu0 0.0
    %1037 = vmatprep.subr.mxu0 0.0
    %1038 = vmatpush1.msra.mxu0 0.0
    %1039 = vmatprep.subr.mxu0 0.0
    %1040 = vmatpush1.msra.mxu0 0.0
    %1041 = vmatprep.subr.mxu0 0.0
    %1042 = vmatpush1.msra.mxu0 0.0
    %1043 = vmatprep.subr.mxu0 0.0
    %1044 = vmatpush1.msra.mxu0 0.0
    %1045 = vmatprep.subr.mxu0 0.0
    %1046 = vmatpush1.msra.mxu0 0.0
    %1047 = vmatprep.subr.mxu0 0.0
    %1048 = vmatpush1.msra.mxu0 0.0
    %1049 = vmatprep.subr.mxu0 0.0
    %1050 = vmatpush1.msra.mxu0 0.0
    %1051 = vmatprep.subr.mxu0 0.0
    %1052 = vmatpush1.msra.mxu0 0.0
    %1053 = vmatprep.subr.mxu0 0.0
    %1054 = vmatpush1.msra.mxu0 0.0
    %1055 = vmatprep.subr.mxu0 0.0
    %1056 = vmatpush1.msra.mxu0 0.0
    %1057 = vmatprep.subr.mxu0 0.0
    %1058 = vmatpush1.msra.mxu0 0.0
    %1059 = vmatprep.subr.mxu0 0.0
    %1060 = vmatpush1.msra.mxu0 0.0
    %1061 = vmatprep.subr.mxu0 0.0
    %1062 = vmatpush1.msra.mxu0 0.0
    %1063 = vmatprep.subr.mxu0 0.0
    %1064 = vmatpush1.msra.mxu0 0.0
    %1065 = vmatprep.subr.mxu0 0.0
    %1066 = vmatpush1.msra.mxu0 0.0
    %1067 = vmatprep.subr.mxu0 0.0
    %1068 = vmatpush1.msra.mxu0 0.0
    %1069 = vmatprep.mubr.f32.mxu0 0.0
    %1070 = vmatmul.mubr.f32.gmra.mrb[0].mxu0 %v506
    %v1071 = vpop.f32.mrb[0].mxu0
    %v1072 = vadd.f32 %v1001, %v1071
    %v1073 = vpop.f32.mrb[0].mxu0
    %v1074 = vadd.f32 %v1003, %v1073
    %1075 = vdwg.mxu0
    %v1076 = vmax.f32 %v788, 0.0
    %v1077 = vmax.f32 %v790, 0.0
    %v1078 = vmax.f32 %v1072, 0.0
    %v1079 = vmax.f32 %v1074, 0.0
    %v1080 = vld [vmem:[#allocation8] sm:$0xff]
    %v1081 = vld [vmem:[#allocation8 + $0x8] sm:$0xff]
    %v1082 = vld [vmem:[#allocation8 + $0x10] sm:$0xff]
    %v1083 = vld [vmem:[#allocation8 + $0x18] sm:$0xff]
    %v1084 = vld [vmem:[#allocation8 + $0x20] sm:$0xff]
    %v1085 = vld [vmem:[#allocation8 + $0x28] sm:$0xff]
    %v1086 = vld [vmem:[#allocation8 + $0x30] sm:$0xff]
    %v1087 = vld [vmem:[#allocation8 + $0x38] sm:$0xff]
    %v1088 = vld [vmem:[#allocation8 + $0x40] sm:$0xff]
    %v1089 = vld [vmem:[#allocation8 + $0x48] sm:$0xff]
    %v1090 = vld [vmem:[#allocation8 + $0x50] sm:$0xff]
    %v1091 = vld [vmem:[#allocation8 + $0x58] sm:$0xff]
    %v1092 = vld [vmem:[#allocation8 + $0x60] sm:$0xff]
    %v1093 = vld [vmem:[#allocation8 + $0x68] sm:$0xff]
    %v1094 = vld [vmem:[#allocation8 + $0x70] sm:$0xff]
    %v1095 = vld [vmem:[#allocation8 + $0x78] sm:$0xff]
    %v1096 = vld [vmem:[#allocation8 + $0x80] sm:$0xff]
    %v1097 = vld [vmem:[#allocation8 + $0x88] sm:$0xff]
    %v1098 = vld [vmem:[#allocation8 + $0x90] sm:$0xff]
    %v1099 = vld [vmem:[#allocation8 + $0x98] sm:$0xff]
    %v1100 = vld [vmem:[#allocation8 + $0xa0] sm:$0xff]
    %v1101 = vld [vmem:[#allocation8 + $0xa8] sm:$0xff]
    %v1102 = vld [vmem:[#allocation8 + $0xb0] sm:$0xff]
    %v1103 = vld [vmem:[#allocation8 + $0xb8] sm:$0xff]
    %v1104 = vld [vmem:[#allocation8 + $0xc0] sm:$0xff]
    %v1105 = vld [vmem:[#allocation8 + $0xc8] sm:$0xff]
    %v1106 = vld [vmem:[#allocation8 + $0xd0] sm:$0xff]
    %v1107 = vld [vmem:[#allocation8 + $0xd8] sm:$0xff]
    %v1108 = vld [vmem:[#allocation8 + $0xe0] sm:$0xff]
    %v1109 = vld [vmem:[#allocation8 + $0xe8] sm:$0xff]
    %v1110 = vld [vmem:[#allocation8 + $0xf0] sm:$0xff]
    %v1111 = vld [vmem:[#allocation8 + $0xf8] sm:$0xff]
    %v1112 = vld [vmem:[#allocation8 + $0x100] sm:$0xff]
    %v1113 = vld [vmem:[#allocation8 + $0x108] sm:$0xff]
    %v1114 = vld [vmem:[#allocation8 + $0x110] sm:$0xff]
    %v1115 = vld [vmem:[#allocation8 + $0x118] sm:$0xff]
    %v1116 = vld [vmem:[#allocation8 + $0x120] sm:$0xff]
    %v1117 = vld [vmem:[#allocation8 + $0x128] sm:$0xff]
    %v1118 = vld [vmem:[#allocation8 + $0x130] sm:$0xff]
    %v1119 = vld [vmem:[#allocation8 + $0x138] sm:$0xff]
    %v1120 = vld [vmem:[#allocation8 + $0x140] sm:$0xff]
    %v1121 = vld [vmem:[#allocation8 + $0x148] sm:$0xff]
    %v1122 = vld [vmem:[#allocation8 + $0x150] sm:$0xff]
    %v1123 = vld [vmem:[#allocation8 + $0x158] sm:$0xff]
    %v1124 = vld [vmem:[#allocation8 + $0x160] sm:$0xff]
    %v1125 = vld [vmem:[#allocation8 + $0x168] sm:$0xff]
    %v1126 = vld [vmem:[#allocation8 + $0x170] sm:$0xff]
    %v1127 = vld [vmem:[#allocation8 + $0x178] sm:$0xff]
    %v1128 = vld [vmem:[#allocation8 + $0x180] sm:$0xff]
    %v1129 = vld [vmem:[#allocation8 + $0x188] sm:$0xff]
    %v1130 = vld [vmem:[#allocation8 + $0x190] sm:$0xff]
    %v1131 = vld [vmem:[#allocation8 + $0x198] sm:$0xff]
    %v1132 = vld [vmem:[#allocation8 + $0x1a0] sm:$0xff]
    %v1133 = vld [vmem:[#allocation8 + $0x1a8] sm:$0xff]
    %v1134 = vld [vmem:[#allocation8 + $0x1b0] sm:$0xff]
    %v1135 = vld [vmem:[#allocation8 + $0x1b8] sm:$0xff]
    %v1136 = vld [vmem:[#allocation8 + $0x1c0] sm:$0xff]
    %v1137 = vld [vmem:[#allocation8 + $0x1c8] sm:$0xff]
    %v1138 = vld [vmem:[#allocation8 + $0x1d0] sm:$0xff]
    %v1139 = vld [vmem:[#allocation8 + $0x1d8] sm:$0xff]
    %v1140 = vld [vmem:[#allocation8 + $0x1e0] sm:$0xff]
    %v1141 = vld [vmem:[#allocation8 + $0x1e8] sm:$0xff]
    %v1142 = vld [vmem:[#allocation8 + $0x1f0] sm:$0xff]
    %v1143 = vld [vmem:[#allocation8 + $0x1f8] sm:$0xff]
    %v1144 = vld [vmem:[#allocation10] sm:$0x1]
    %v1146 = vlaneseq
    %v1147 = vshrl.u32 %v1146, 7
    %v1148 = vsub.s32 0, %v1147
    %v1149 = vrot.slane %v1144, %v1148
    %1151 = vmatprep.subr.mxu0 0.0
    %1152 = vmatpush1.msra.mxu0 %v1080
    %1153 = vmatprep.subr.mxu0 0.0
    %1154 = vmatpush1.msra.mxu0 %v1081
    %1155 = vmatprep.subr.mxu0 0.0
    %1156 = vmatpush1.msra.mxu0 %v1082
    %1157 = vmatprep.subr.mxu0 0.0
    %1158 = vmatpush1.msra.mxu0 %v1083
    %1159 = vmatprep.subr.mxu0 0.0
    %1160 = vmatpush1.msra.mxu0 %v1084
    %1161 = vmatprep.subr.mxu0 0.0
    %1162 = vmatpush1.msra.mxu0 %v1085
    %1163 = vmatprep.subr.mxu0 0.0
    %1164 = vmatpush1.msra.mxu0 %v1086
    %1165 = vmatprep.subr.mxu0 0.0
    %1166 = vmatpush1.msra.mxu0 %v1087
    %1167 = vmatprep.subr.mxu0 0.0
    %1168 = vmatpush1.msra.mxu0 %v1088
    %1169 = vmatprep.subr.mxu0 0.0
    %1170 = vmatpush1.msra.mxu0 %v1089
    %1171 = vmatprep.subr.mxu0 0.0
    %1172 = vmatpush1.msra.mxu0 %v1090
    %1173 = vmatprep.subr.mxu0 0.0
    %1174 = vmatpush1.msra.mxu0 %v1091
    %1175 = vmatprep.subr.mxu0 0.0
    %1176 = vmatpush1.msra.mxu0 %v1092
    %1177 = vmatprep.subr.mxu0 0.0
    %1178 = vmatpush1.msra.mxu0 %v1093
    %1179 = vmatprep.subr.mxu0 0.0
    %1180 = vmatpush1.msra.mxu0 %v1094
    %1181 = vmatprep.subr.mxu0 0.0
    %1182 = vmatpush1.msra.mxu0 %v1095
    %1183 = vmatprep.subr.mxu0 0.0
    %1184 = vmatpush1.msra.mxu0 %v1096
    %1185 = vmatprep.subr.mxu0 0.0
    %1186 = vmatpush1.msra.mxu0 %v1097
    %1187 = vmatprep.subr.mxu0 0.0
    %1188 = vmatpush1.msra.mxu0 %v1098
    %1189 = vmatprep.subr.mxu0 0.0
    %1190 = vmatpush1.msra.mxu0 %v1099
    %1191 = vmatprep.subr.mxu0 0.0
    %1192 = vmatpush1.msra.mxu0 %v1100
    %1193 = vmatprep.subr.mxu0 0.0
    %1194 = vmatpush1.msra.mxu0 %v1101
    %1195 = vmatprep.subr.mxu0 0.0
    %1196 = vmatpush1.msra.mxu0 %v1102
    %1197 = vmatprep.subr.mxu0 0.0
    %1198 = vmatpush1.msra.mxu0 %v1103
    %1199 = vmatprep.subr.mxu0 0.0
    %1200 = vmatpush1.msra.mxu0 %v1104
    %1201 = vmatprep.subr.mxu0 0.0
    %1202 = vmatpush1.msra.mxu0 %v1105
    %1203 = vmatprep.subr.mxu0 0.0
    %1204 = vmatpush1.msra.mxu0 %v1106
    %1205 = vmatprep.subr.mxu0 0.0
    %1206 = vmatpush1.msra.mxu0 %v1107
    %1207 = vmatprep.subr.mxu0 0.0
    %1208 = vmatpush1.msra.mxu0 %v1108
    %1209 = vmatprep.subr.mxu0 0.0
    %1210 = vmatpush1.msra.mxu0 %v1109
    %1211 = vmatprep.subr.mxu0 0.0
    %1212 = vmatpush1.msra.mxu0 %v1110
    %1213 = vmatprep.subr.mxu0 0.0
    %1214 = vmatpush1.msra.mxu0 %v1111
    %1215 = vmatprep.mubr.f32.mxu0 %v1077
    %1216 = vmatmul.mubr.f32.gmra.mrb[0].mxu0 %v1076
    %v1217 = vpop.f32.mrb[0].mxu0
    %v1218 = vadd.f32 %v1149, %v1217
    %v1219 = vpop.f32.mrb[0].mxu0
    %1220 = vdwg.mxu0
    %1221 = vmatprep.subr.mxu0 0.0
    %1222 = vmatpush1.msra.mxu0 %v1112
    %1223 = vmatprep.subr.mxu0 0.0
    %1224 = vmatpush1.msra.mxu0 %v1113
    %1225 = vmatprep.subr.mxu0 0.0
    %1226 = vmatpush1.msra.mxu0 %v1114
    %1227 = vmatprep.subr.mxu0 0.0
    %1228 = vmatpush1.msra.mxu0 %v1115
    %1229 = vmatprep.subr.mxu0 0.0
    %1230 = vmatpush1.msra.mxu0 %v1116
    %1231 = vmatprep.subr.mxu0 0.0
    %1232 = vmatpush1.msra.mxu0 %v1117
    %1233 = vmatprep.subr.mxu0 0.0
    %1234 = vmatpush1.msra.mxu0 %v1118
    %1235 = vmatprep.subr.mxu0 0.0
    %1236 = vmatpush1.msra.mxu0 %v1119
    %1237 = vmatprep.subr.mxu0 0.0
    %1238 = vmatpush1.msra.mxu0 %v1120
    %1239 = vmatprep.subr.mxu0 0.0
    %1240 = vmatpush1.msra.mxu0 %v1121
    %1241 = vmatprep.subr.mxu0 0.0
    %1242 = vmatpush1.msra.mxu0 %v1122
    %1243 = vmatprep.subr.mxu0 0.0
    %1244 = vmatpush1.msra.mxu0 %v1123
    %1245 = vmatprep.subr.mxu0 0.0
    %1246 = vmatpush1.msra.mxu0 %v1124
    %1247 = vmatprep.subr.mxu0 0.0
    %1248 = vmatpush1.msra.mxu0 %v1125
    %1249 = vmatprep.subr.mxu0 0.0
    %1250 = vmatpush1.msra.mxu0 %v1126
    %1251 = vmatprep.subr.mxu0 0.0
    %1252 = vmatpush1.msra.mxu0 %v1127
    %1253 = vmatprep.subr.mxu0 0.0
    %1254 = vmatpush1.msra.mxu0 %v1128
    %1255 = vmatprep.subr.mxu0 0.0
    %1256 = vmatpush1.msra.mxu0 %v1129
    %1257 = vmatprep.subr.mxu0 0.0
    %1258 = vmatpush1.msra.mxu0 %v1130
    %1259 = vmatprep.subr.mxu0 0.0
    %1260 = vmatpush1.msra.mxu0 %v1131
    %1261 = vmatprep.subr.mxu0 0.0
    %1262 = vmatpush1.msra.mxu0 %v1132
    %1263 = vmatprep.subr.mxu0 0.0
    %1264 = vmatpush1.msra.mxu0 %v1133
    %1265 = vmatprep.subr.mxu0 0.0
    %1266 = vmatpush1.msra.mxu0 %v1134
    %1267 = vmatprep.subr.mxu0 0.0
    %1268 = vmatpush1.msra.mxu0 %v1135
    %1269 = vmatprep.subr.mxu0 0.0
    %1270 = vmatpush1.msra.mxu0 %v1136
    %1271 = vmatprep.subr.mxu0 0.0
    %1272 = vmatpush1.msra.mxu0 %v1137
    %1273 = vmatprep.subr.mxu0 0.0
    %1274 = vmatpush1.msra.mxu0 %v1138
    %1275 = vmatprep.subr.mxu0 0.0
    %1276 = vmatpush1.msra.mxu0 %v1139
    %1277 = vmatprep.subr.mxu0 0.0
    %1278 = vmatpush1.msra.mxu0 %v1140
    %1279 = vmatprep.subr.mxu0 0.0
    %1280 = vmatpush1.msra.mxu0 %v1141
    %1281 = vmatprep.subr.mxu0 0.0
    %1282 = vmatpush1.msra.mxu0 %v1142
    %1283 = vmatprep.subr.mxu0 0.0
    %1284 = vmatpush1.msra.mxu0 %v1143
    %1285 = vmatprep.mubr.f32.mxu0 %v1079
    %1286 = vmatmul.mubr.f32.gmra.mrb[0].mxu0 %v1078
    %v1287 = vpop.f32.mrb[0].mxu0
    %v1288 = vadd.f32 %v1218, %v1287
    %v1289 = vpop.f32.mrb[0].mxu0
    %1290 = vdwg.mxu0
    %1291 = vst [vmem:[#allocation11] sm:$0xff] %v1288
    // Predicated region
    $region42: #{tpu_custom_call.1} parent=1 // pred_check
      _
    $region43: #{tpu_custom_call.1} parent=1 // pred_check_branch
      %1293 = sbr.rel (0) target = $region45
    $region44: #{tpu_custom_call.1} parent=1 // pred_region
      %s1295 = ssub.s32 128, 128
      %1296 = vsyncadd [#allocation4], %s1295
      %s1298 = sshll.u32 [#allocation11], 4
      %s1299 = int_to_ptr.vmem [resolvable:$true] %s1298
      %1301 = dma.vmem_to_hbm [thread:$0]  %s1299, 128, %s5, [#allocation4]
    $region45: #{tpu_custom_call.1} parent=1 // pred_fallthru
      _
    // Predicated region
    $region46: #{tpu_custom_call.1} parent=1 // pred_check
      _
    $region47: #{tpu_custom_call.1} parent=1 // pred_check_branch
      %1303 = sbr.rel (0) target = $region49
    $region48: #{tpu_custom_call.1} parent=1 // pred_region
      %1304 = dma.done [#allocation4], 128
    $region49: #{tpu_custom_call.1} parent=1 // pred_fallthru
      _
    %1305 = vsyncpa [#allocation3], 1
    %1306 = vsyncpa [#allocation6], 1
    %1307 = vsyncpa [#allocation9], 1
    %1308 = vsyncpa [#allocation4], 1

</llo_original>
